<compile_context>
chip_gen: v5e
topology: v5e:2x2
jax: 0.10.0
libtpu: 0.0.40
codegen_flags: <defaults>
</compile_context>

<pallas_src>
import jax
import jax.numpy as jnp
from jax.experimental import pallas as pl
from jax.experimental.pallas import tpu as pltpu


def _round_up(n, m):
    return ((n + m - 1) // m) * m


# ------------------------------ fused kernel --------------------------------


def _make_fused_lstm_kernel(num_layers, T, B, H):
    """Fused kernel: all LSTM layers + final FC.

    Ref layout (all full-array VMEM blocks):
      x_ref:   (T*B, D_pad)    time-major, rows = t*B + b
      w_in0:   (D_pad, 4H)     layer-0 input weights, gate order [i,f,o,g],
                               i/f/o columns pre-scaled by 0.5
      b_l:     (1, 4H)         per layer, b_ih+b_hh, [i,f,o,g], i/f/o * 0.5
      w_rec_l: (H, 8H) for l < L-1  ->  [ W_hh_l | W_ih_{l+1} ]
               (H, 4H) for l == L-1 ->    W_hh_{L-1}
      fc_w (H, O_pad), fc_b (1, O_pad)
      out_ref: (B, O_pad)
    Scratch:
      gbuf_a / gbuf_b: (T*B, 4H) f32 -- ping-pong input-projection buffers.
    """

    def kernel(*refs):
        x_ref = refs[0]
        w_in0_ref = refs[1]
        b_refs = refs[2:2 + num_layers]
        w_rec_refs = refs[2 + num_layers:2 + 2 * num_layers]
        fcw_ref = refs[2 + 2 * num_layers]
        fcb_ref = refs[3 + 2 * num_layers]
        out_ref = refs[4 + 2 * num_layers]
        gbuf_a, gbuf_b = refs[5 + 2 * num_layers:]

        # Hoisted activation lane masks: lanes [0, 3H) carry the sigmoid gates
        # (weights pre-scaled by 0.5), lanes [3H, 4H) carry the tanh 'g' gate.
        lane = jax.lax.broadcasted_iota(jnp.int32, (B, 4 * H), 1)
        is_sig = lane < 3 * H
        act_scale = jnp.where(is_sig, 0.5, 1.0).astype(jnp.float32)
        act_off = jnp.where(is_sig, 0.5, 0.0).astype(jnp.float32)

        # Layer-0 input projection for ALL timesteps at once (bias included).
        gbuf_a[...] = (
            jnp.dot(x_ref[...], w_in0_ref[...],
                    preferred_element_type=jnp.float32)
            + b_refs[0][...]
        )

        gbufs = (gbuf_a, gbuf_b)
        h_last = None
        for l in range(num_layers):
            g_cur = gbufs[l % 2]            # this layer's precomputed x-projection
            g_nxt = gbufs[(l + 1) % 2]      # next layer's projection (written here)
            last = (l == num_layers - 1)
            w_rec = w_rec_refs[l][...]      # hoist (H, 4H or 8H) weight load
            b_nxt = None if last else b_refs[l + 1][...]

            h = jnp.zeros((B, H), jnp.float32)
            c = jnp.zeros((B, H), jnp.float32)
            z_rec = None                    # h_{t-1} @ W_hh ; None == zeros at t=0

            # Fully-unrolled recurrence (T small & static): h/c stay in vregs,
            # static row slices, one fused MXU pass per serial step.
            for t in range(T):
                r0 = t * B
                gates = g_cur[r0:r0 + B, :]
                if z_rec is not None:
                    gates = gates + z_rec
                # One full-width EUP tanh; sigmoid recovered on the VPU.
                act = jnp.tanh(gates) * act_scale + act_off
                i_g = act[:, :H]
                f_g = act[:, H:2 * H]
                o_g = act[:, 2 * H:3 * H]
                g_g = act[:, 3 * H:]
                c = f_g * c + i_g * g_g
                h = o_g * jnp.tanh(c)

                need_rec = t < T - 1        # next step needs h @ W_hh
                if need_rec or not last:
                    z = jnp.dot(h, w_rec, preferred_element_type=jnp.float32)
                    z_rec = z[:, :4 * H]
                    if not last:
                        # Next layer's input projection for step t (lane-dense).
                        g_nxt[r0:r0 + B, :] = z[:, 4 * H:] + b_nxt
            h_last = h
            # TODO(synk): nn.LSTM inter-layer dropout (p=0.2) is training-only;
            # eval-mode forward implemented here.

        # Final FC on h_T of the last layer (lane-dense O_pad output).
        out_ref[...] = (
            jnp.dot(h_last, fcw_ref[...], preferred_element_type=jnp.float32)
            + fcb_ref[...]
        )

    return kernel


# -------------------------------- wrapper ------------------------------------


def lstm_model_forward(x, packed):
    """x: (B, T, input_size) float32, batch_first — same as the PyTorch module."""
    B, T, D = x.shape
    H = packed["hidden_size"]
    O = packed["output_size"]
    L = packed["num_layers"]
    B_pad = _round_up(B, 8)
    D_pad = _round_up(D, 8)
    O_pad = packed["fc_w"].shape[-1]

    x_p = jnp.pad(x.astype(jnp.float32),
                  ((0, B_pad - B), (0, 0), (0, D_pad - D)))
    x_flat = jnp.transpose(x_p, (1, 0, 2)).reshape(T * B_pad, D_pad)

    w_in0 = packed["w_in0"]
    if w_in0.shape[0] != D_pad:
        w_in0 = jnp.pad(w_in0, ((0, D_pad - w_in0.shape[0]), (0, 0)))

    inputs = ([x_flat, w_in0]
              + list(packed["b"])
              + list(packed["w_rec"])
              + [packed["fc_w"], packed["fc_b"]])

    kernel = _make_fused_lstm_kernel(L, T, B_pad, H)
    out = pl.pallas_call(
        kernel,
        out_shape=jax.ShapeDtypeStruct((B_pad, O_pad), jnp.float32),
        in_specs=[pl.BlockSpec(memory_space=pltpu.MemorySpace.VMEM)] * len(inputs),
        out_specs=pl.BlockSpec(memory_space=pltpu.MemorySpace.VMEM),
        scratch_shapes=[
            pltpu.VMEM((T * B_pad, 4 * H), jnp.float32),   # gbuf_a
            pltpu.VMEM((T * B_pad, 4 * H), jnp.float32),   # gbuf_b
        ],
    )(*inputs)
    return out[:B, :O]


# ------------------------ params (PyTorch layout) -----------------------------


def init_params(key, input_size, hidden_size, num_layers, output_size):
    """Raw PyTorch-format LSTM/Linear params: uniform(-1/sqrt(H), 1/sqrt(H))."""
    k = 1.0 / (hidden_size ** 0.5)
    params = {"layers": [], "hidden_size": hidden_size, "output_size": output_size}
    for layer in range(num_layers):
        d_in = input_size if layer == 0 else hidden_size
        key, k1, k2, k3, k4 = jax.random.split(key, 5)
        params["layers"].append({
            "w_ih": jax.random.uniform(k1, (4 * hidden_size, d_in), jnp.float32, -k, k),
            "w_hh": jax.random.uniform(k2, (4 * hidden_size, hidden_size), jnp.float32, -k, k),
            "b_ih": jax.random.uniform(k3, (4 * hidden_size,), jnp.float32, -k, k),
            "b_hh": jax.random.uniform(k4, (4 * hidden_size,), jnp.float32, -k, k),
        })
    key, k5, k6 = jax.random.split(key, 3)
    params["fc_w"] = jax.random.uniform(k5, (output_size, hidden_size), jnp.float32, -k, k)
    params["fc_b"] = jax.random.uniform(k6, (output_size,), jnp.float32, -k, k)
    return params


_GATE_PERM = jnp.array([0, 1, 3, 2])   # PyTorch [i, f, g, o] -> packed [i, f, o, g]


def pack_params(params, lane=128):
    """Repack for the kernel.

    * gate order [i,f,o,g]; bias pre-summed (b_ih + b_hh)
    * i/f/o columns of W_ih, W_hh, b pre-scaled by 0.5 (sigmoid-via-tanh trick)
    * recurrent RHS of layer l fused with layer l+1's input weights:
        w_rec_l = [ W_hh_l | W_ih_{l+1} ]  -> (H, 8H); last layer keeps (H, 4H)
    """
    H = params["hidden_size"]
    O = params["output_size"]
    L = len(params["layers"])
    O_pad = _round_up(O, lane)
    col_scale = jnp.concatenate(
        [jnp.full((1, 3 * H), 0.5, jnp.float32), jnp.ones((1, H), jnp.float32)],
        axis=-1)

    w_ih_l, w_hh_l, b_l = [], [], []
    for lp in params["layers"]:
        d_in = lp["w_ih"].shape[1]
        w_ih = lp["w_ih"].reshape(4, H, d_in)[_GATE_PERM].reshape(4 * H, d_in).T * col_scale
        w_hh = lp["w_hh"].reshape(4, H, H)[_GATE_PERM].reshape(4 * H, H).T * col_scale
        b = (lp["b_ih"] + lp["b_hh"]).reshape(4, H)[_GATE_PERM].reshape(1, 4 * H) * col_scale
        w_ih_l.append(w_ih)
        w_hh_l.append(w_hh)
        b_l.append(b)

    w_rec = []
    for l in range(L):
        if l < L - 1:
            w_rec.append(jnp.concatenate([w_hh_l[l], w_ih_l[l + 1]], axis=1))  # (H, 8H)
        else:
            w_rec.append(w_hh_l[l])                                            # (H, 4H)

    packed = {
        "hidden_size": H, "output_size": O, "num_layers": L,
        "w_in0": w_ih_l[0],                     # (D, 4H); padded to D_pad in wrapper
        "b": b_l,
        "w_rec": w_rec,
        "fc_w": jnp.pad(params["fc_w"].T, ((0, 0), (0, O_pad - O))),          # (H, O_pad)
        "fc_b": jnp.pad(params["fc_b"].reshape(1, O), ((0, 0), (0, O_pad - O))),
    }
    return packed


# ------------------------- pure-JAX reference check ---------------------------


def _ref_forward(x, params):
    """Reference using the RAW PyTorch-layout weights (gate order i,f,g,o)."""
    B, T, _ = x.shape
    H = params["hidden_size"]
    h_seq = x.astype(jnp.float32)
    for lp in params["layers"]:
        w_ih, w_hh = lp["w_ih"], lp["w_hh"]
        b = lp["b_ih"] + lp["b_hh"]
        h = jnp.zeros((B, H), jnp.float32)
        c = jnp.zeros((B, H), jnp.float32)
        outs = []
        for t in range(T):
            g = h_seq[:, t, :] @ w_ih.T + h @ w_hh.T + b
            i_g = jax.nn.sigmoid(g[:, 0 * H:1 * H])
            f_g = jax.nn.sigmoid(g[:, 1 * H:2 * H])
            g_g = jnp.tanh(g[:, 2 * H:3 * H])
            o_g = jax.nn.sigmoid(g[:, 3 * H:4 * H])
            c = f_g * c + i_g * g_g
            h = o_g * jnp.tanh(c)
            outs.append(h)
        h_seq = jnp.stack(outs, axis=1)
    return h_seq[:, -1, :] @ params["fc_w"].T + params["fc_b"]


# ----------------------------------- main ------------------------------------

if __name__ == "__main__":
    B, T = 2, 8
    input_size, hidden_size, num_layers, output_size = 1, 32, 3, 1

    key = jax.random.PRNGKey(0)
    key, pkey, xkey = jax.random.split(key, 3)
    params = init_params(pkey, input_size, hidden_size, num_layers, output_size)
    packed = pack_params(params)
    x = jax.random.normal(xkey, (B, T, input_size), jnp.float32)

    out = jax.block_until_ready(lstm_model_forward(x, packed))
    assert out.shape == (B, output_size), out.shape

    ref = jax.block_until_ready(_ref_forward(x, params))
    assert jnp.allclose(out, ref, atol=1e-4, rtol=1e-4), (out, ref)

    print("KERNEL_OK")
</pallas_src>

<mosaic_0001>
module attributes {stable_mosaic.version = 11 : i64} {
  func.func @kernel(%arg0: memref<64x8xf32, #tpu.memory_space<vmem>>, %arg1: memref<8x128xf32, #tpu.memory_space<vmem>>, %arg2: memref<1x128xf32, #tpu.memory_space<vmem>>, %arg3: memref<1x128xf32, #tpu.memory_space<vmem>>, %arg4: memref<1x128xf32, #tpu.memory_space<vmem>>, %arg5: memref<32x256xf32, #tpu.memory_space<vmem>>, %arg6: memref<32x256xf32, #tpu.memory_space<vmem>>, %arg7: memref<32x128xf32, #tpu.memory_space<vmem>>, %arg8: memref<32x128xf32, #tpu.memory_space<vmem>>, %arg9: memref<1x128xf32, #tpu.memory_space<vmem>>, %arg10: memref<8x128xf32, #tpu.memory_space<vmem>>, %arg11: memref<64x128xf32, #tpu.memory_space<vmem>>, %arg12: memref<64x128xf32, #tpu.memory_space<vmem>>) attributes {dimension_semantics = [], scalar_prefetch = 0 : i64, scratch_operands = 2 : i64, tpu.core_type = #tpu.core_type<tc>} {
    %0 = tpu.iota {dimensions = array<i32: 1>} : vector<8x128xi32>
    %c96_i32 = arith.constant 96 : i32
    %1 = vector.broadcast %c96_i32 : i32 to vector<8x128xi32>
    %2 = arith.cmpi slt, %0, %1 : vector<8x128xi32>
    %cst = arith.constant 5.000000e-01 : f32
    %cst_0 = arith.constant 1.000000e+00 : f32
    %3 = vector.broadcast %cst : f32 to vector<8x128xf32>
    %4 = vector.broadcast %cst_0 : f32 to vector<8x128xf32>
    %5 = arith.select %2, %3, %4 : vector<8x128xi1>, vector<8x128xf32>
    %cst_1 = arith.constant 5.000000e-01 : f32
    %cst_2 = arith.constant 0.000000e+00 : f32
    %6 = vector.broadcast %cst_1 : f32 to vector<8x128xf32>
    %7 = vector.broadcast %cst_2 : f32 to vector<8x128xf32>
    %8 = arith.select %2, %6, %7 : vector<8x128xi1>, vector<8x128xf32>
    %c0 = arith.constant 0 : index
    %c0_3 = arith.constant 0 : index
    %9 = vector.load %arg0[%c0, %c0_3] : memref<64x8xf32, #tpu.memory_space<vmem>>, vector<64x8xf32>
    %c0_4 = arith.constant 0 : index
    %c0_5 = arith.constant 0 : index
    %10 = vector.load %arg1[%c0_4, %c0_5] : memref<8x128xf32, #tpu.memory_space<vmem>>, vector<8x128xf32>
    %cst_6 = arith.constant dense<0.000000e+00> : vector<64x128xf32>
    %11 = tpu.matmul %9, %10, %cst_6 {dimension_numbers = #tpu.dot_dimension_numbers<[1], [0], [0], [1], [0, 0, 1, 1], [], []>} : vector<64x8xf32>, vector<8x128xf32>, vector<64x128xf32> -> vector<64x128xf32>
    %c0_7 = arith.constant 0 : index
    %c0_8 = arith.constant 0 : index
    %12 = vector.load %arg2[%c0_7, %c0_8] : memref<1x128xf32, #tpu.memory_space<vmem>>, vector<1x128xf32>
    %13 = vector.broadcast %12 : vector<1x128xf32> to vector<64x128xf32>
    %14 = arith.addf %11, %13 : vector<64x128xf32>
    %c0_9 = arith.constant 0 : index
    %c0_10 = arith.constant 0 : index
    %15 = vector.load %arg11[%c0_9, %c0_10] : memref<64x128xf32, #tpu.memory_space<vmem>>, vector<64x128xf32>
    tpu.vector_store %arg11[%c0_9, %c0_10], %14 {strides = array<i32>} : memref<64x128xf32, #tpu.memory_space<vmem>>, vector<64x128xf32>,
    %c0_11 = arith.constant 0 : index
    %c0_12 = arith.constant 0 : index
    %16 = vector.load %arg5[%c0_11, %c0_12] : memref<32x256xf32, #tpu.memory_space<vmem>>, vector<32x256xf32>
    %c0_13 = arith.constant 0 : index
    %c0_14 = arith.constant 0 : index
    %17 = vector.load %arg3[%c0_13, %c0_14] : memref<1x128xf32, #tpu.memory_space<vmem>>, vector<1x128xf32>
    %cst_15 = arith.constant 0.000000e+00 : f32
    %18 = vector.broadcast %cst_15 : f32 to vector<8x32xf32>
    %c0_16 = arith.constant 0 : index
    %c0_17 = arith.constant 0 : index
    %19 = vector.load %arg11[%c0_16, %c0_17] : memref<64x128xf32, #tpu.memory_space<vmem>>, vector<8x128xf32>
    %20 = math.tanh %19 : vector<8x128xf32>
    %21 = arith.mulf %20, %5 : vector<8x128xf32>
    %22 = arith.addf %21, %8 : vector<8x128xf32>
    %23 = vector.extract_strided_slice %22 {offsets = [0, 0], sizes = [8, 32], strides = [1, 1]} : vector<8x128xf32> to vector<8x32xf32>
    %24 = vector.extract_strided_slice %22 {offsets = [0, 32], sizes = [8, 32], strides = [1, 1]} : vector<8x128xf32> to vector<8x32xf32>
    %25 = vector.extract_strided_slice %22 {offsets = [0, 64], sizes = [8, 32], strides = [1, 1]} : vector<8x128xf32> to vector<8x32xf32>
    %26 = vector.extract_strided_slice %22 {offsets = [0, 96], sizes = [8, 32], strides = [1, 1]} : vector<8x128xf32> to vector<8x32xf32>
    %27 = arith.mulf %24, %18 : vector<8x32xf32>
    %28 = arith.mulf %23, %26 : vector<8x32xf32>
    %29 = arith.addf %27, %28 : vector<8x32xf32>
    %30 = math.tanh %29 : vector<8x32xf32>
    %31 = arith.mulf %25, %30 : vector<8x32xf32>
    %cst_18 = arith.constant dense<0.000000e+00> : vector<8x256xf32>
    %32 = tpu.matmul %31, %16, %cst_18 {dimension_numbers = #tpu.dot_dimension_numbers<[1], [0], [0], [1], [0, 0, 1, 1], [], []>} : vector<8x32xf32>, vector<32x256xf32>, vector<8x256xf32> -> vector<8x256xf32>
    %33 = vector.extract_strided_slice %32 {offsets = [0, 0], sizes = [8, 128], strides = [1, 1]} : vector<8x256xf32> to vector<8x128xf32>
    %34 = vector.extract_strided_slice %32 {offsets = [0, 128], sizes = [8, 128], strides = [1, 1]} : vector<8x256xf32> to vector<8x128xf32>
    %35 = vector.broadcast %17 : vector<1x128xf32> to vector<8x128xf32>
    %36 = arith.addf %34, %35 : vector<8x128xf32>
    %c0_19 = arith.constant 0 : index
    %c0_20 = arith.constant 0 : index
    %37 = vector.load %arg12[%c0_19, %c0_20] : memref<64x128xf32, #tpu.memory_space<vmem>>, vector<8x128xf32>
    tpu.vector_store %arg12[%c0_19, %c0_20], %36 {strides = array<i32>} : memref<64x128xf32, #tpu.memory_space<vmem>>, vector<8x128xf32>,
    %c8 = arith.constant 8 : index
    %c0_21 = arith.constant 0 : index
    %38 = vector.load %arg11[%c8, %c0_21] : memref<64x128xf32, #tpu.memory_space<vmem>>, vector<8x128xf32>
    %39 = arith.addf %38, %33 : vector<8x128xf32>
    %40 = math.tanh %39 : vector<8x128xf32>
    %41 = arith.mulf %40, %5 : vector<8x128xf32>
    %42 = arith.addf %41, %8 : vector<8x128xf32>
    %43 = vector.extract_strided_slice %42 {offsets = [0, 0], sizes = [8, 32], strides = [1, 1]} : vector<8x128xf32> to vector<8x32xf32>
    %44 = vector.extract_strided_slice %42 {offsets = [0, 32], sizes = [8, 32], strides = [1, 1]} : vector<8x128xf32> to vector<8x32xf32>
    %45 = vector.extract_strided_slice %42 {offsets = [0, 64], sizes = [8, 32], strides = [1, 1]} : vector<8x128xf32> to vector<8x32xf32>
    %46 = vector.extract_strided_slice %42 {offsets = [0, 96], sizes = [8, 32], strides = [1, 1]} : vector<8x128xf32> to vector<8x32xf32>
    %47 = arith.mulf %44, %29 : vector<8x32xf32>
    %48 = arith.mulf %43, %46 : vector<8x32xf32>
    %49 = arith.addf %47, %48 : vector<8x32xf32>
    %50 = math.tanh %49 : vector<8x32xf32>
    %51 = arith.mulf %45, %50 : vector<8x32xf32>
    %cst_22 = arith.constant dense<0.000000e+00> : vector<8x256xf32>
    %52 = tpu.matmul %51, %16, %cst_22 {dimension_numbers = #tpu.dot_dimension_numbers<[1], [0], [0], [1], [0, 0, 1, 1], [], []>} : vector<8x32xf32>, vector<32x256xf32>, vector<8x256xf32> -> vector<8x256xf32>
    %53 = vector.extract_strided_slice %52 {offsets = [0, 0], sizes = [8, 128], strides = [1, 1]} : vector<8x256xf32> to vector<8x128xf32>
    %54 = vector.extract_strided_slice %52 {offsets = [0, 128], sizes = [8, 128], strides = [1, 1]} : vector<8x256xf32> to vector<8x128xf32>
    %55 = vector.broadcast %17 : vector<1x128xf32> to vector<8x128xf32>
    %56 = arith.addf %54, %55 : vector<8x128xf32>
    %c8_23 = arith.constant 8 : index
    %c0_24 = arith.constant 0 : index
    %57 = vector.load %arg12[%c8_23, %c0_24] : memref<64x128xf32, #tpu.memory_space<vmem>>, vector<8x128xf32>
    tpu.vector_store %arg12[%c8_23, %c0_24], %56 {strides = array<i32>} : memref<64x128xf32, #tpu.memory_space<vmem>>, vector<8x128xf32>,
    %c16 = arith.constant 16 : index
    %c0_25 = arith.constant 0 : index
    %58 = vector.load %arg11[%c16, %c0_25] : memref<64x128xf32, #tpu.memory_space<vmem>>, vector<8x128xf32>
    %59 = arith.addf %58, %53 : vector<8x128xf32>
    %60 = math.tanh %59 : vector<8x128xf32>
    %61 = arith.mulf %60, %5 : vector<8x128xf32>
    %62 = arith.addf %61, %8 : vector<8x128xf32>
    %63 = vector.extract_strided_slice %62 {offsets = [0, 0], sizes = [8, 32], strides = [1, 1]} : vector<8x128xf32> to vector<8x32xf32>
    %64 = vector.extract_strided_slice %62 {offsets = [0, 32], sizes = [8, 32], strides = [1, 1]} : vector<8x128xf32> to vector<8x32xf32>
    %65 = vector.extract_strided_slice %62 {offsets = [0, 64], sizes = [8, 32], strides = [1, 1]} : vector<8x128xf32> to vector<8x32xf32>
    %66 = vector.extract_strided_slice %62 {offsets = [0, 96], sizes = [8, 32], strides = [1, 1]} : vector<8x128xf32> to vector<8x32xf32>
    %67 = arith.mulf %64, %49 : vector<8x32xf32>
    %68 = arith.mulf %63, %66 : vector<8x32xf32>
    %69 = arith.addf %67, %68 : vector<8x32xf32>
    %70 = math.tanh %69 : vector<8x32xf32>
    %71 = arith.mulf %65, %70 : vector<8x32xf32>
    %cst_26 = arith.constant dense<0.000000e+00> : vector<8x256xf32>
    %72 = tpu.matmul %71, %16, %cst_26 {dimension_numbers = #tpu.dot_dimension_numbers<[1], [0], [0], [1], [0, 0, 1, 1], [], []>} : vector<8x32xf32>, vector<32x256xf32>, vector<8x256xf32> -> vector<8x256xf32>
    %73 = vector.extract_strided_slice %72 {offsets = [0, 0], sizes = [8, 128], strides = [1, 1]} : vector<8x256xf32> to vector<8x128xf32>
    %74 = vector.extract_strided_slice %72 {offsets = [0, 128], sizes = [8, 128], strides = [1, 1]} : vector<8x256xf32> to vector<8x128xf32>
    %75 = vector.broadcast %17 : vector<1x128xf32> to vector<8x128xf32>
    %76 = arith.addf %74, %75 : vector<8x128xf32>
    %c16_27 = arith.constant 16 : index
    %c0_28 = arith.constant 0 : index
    %77 = vector.load %arg12[%c16_27, %c0_28] : memref<64x128xf32, #tpu.memory_space<vmem>>, vector<8x128xf32>
    tpu.vector_store %arg12[%c16_27, %c0_28], %76 {strides = array<i32>} : memref<64x128xf32, #tpu.memory_space<vmem>>, vector<8x128xf32>,
    %c24 = arith.constant 24 : index
    %c0_29 = arith.constant 0 : index
    %78 = vector.load %arg11[%c24, %c0_29] : memref<64x128xf32, #tpu.memory_space<vmem>>, vector<8x128xf32>
    %79 = arith.addf %78, %73 : vector<8x128xf32>
    %80 = math.tanh %79 : vector<8x128xf32>
    %81 = arith.mulf %80, %5 : vector<8x128xf32>
    %82 = arith.addf %81, %8 : vector<8x128xf32>
    %83 = vector.extract_strided_slice %82 {offsets = [0, 0], sizes = [8, 32], strides = [1, 1]} : vector<8x128xf32> to vector<8x32xf32>
    %84 = vector.extract_strided_slice %82 {offsets = [0, 32], sizes = [8, 32], strides = [1, 1]} : vector<8x128xf32> to vector<8x32xf32>
    %85 = vector.extract_strided_slice %82 {offsets = [0, 64], sizes = [8, 32], strides = [1, 1]} : vector<8x128xf32> to vector<8x32xf32>
    %86 = vector.extract_strided_slice %82 {offsets = [0, 96], sizes = [8, 32], strides = [1, 1]} : vector<8x128xf32> to vector<8x32xf32>
    %87 = arith.mulf %84, %69 : vector<8x32xf32>
    %88 = arith.mulf %83, %86 : vector<8x32xf32>
    %89 = arith.addf %87, %88 : vector<8x32xf32>
    %90 = math.tanh %89 : vector<8x32xf32>
    %91 = arith.mulf %85, %90 : vector<8x32xf32>
    %cst_30 = arith.constant dense<0.000000e+00> : vector<8x256xf32>
    %92 = tpu.matmul %91, %16, %cst_30 {dimension_numbers = #tpu.dot_dimension_numbers<[1], [0], [0], [1], [0, 0, 1, 1], [], []>} : vector<8x32xf32>, vector<32x256xf32>, vector<8x256xf32> -> vector<8x256xf32>
    %93 = vector.extract_strided_slice %92 {offsets = [0, 0], sizes = [8, 128], strides = [1, 1]} : vector<8x256xf32> to vector<8x128xf32>
    %94 = vector.extract_strided_slice %92 {offsets = [0, 128], sizes = [8, 128], strides = [1, 1]} : vector<8x256xf32> to vector<8x128xf32>
    %95 = vector.broadcast %17 : vector<1x128xf32> to vector<8x128xf32>
    %96 = arith.addf %94, %95 : vector<8x128xf32>
    %c24_31 = arith.constant 24 : index
    %c0_32 = arith.constant 0 : index
    %97 = vector.load %arg12[%c24_31, %c0_32] : memref<64x128xf32, #tpu.memory_space<vmem>>, vector<8x128xf32>
    tpu.vector_store %arg12[%c24_31, %c0_32], %96 {strides = array<i32>} : memref<64x128xf32, #tpu.memory_space<vmem>>, vector<8x128xf32>,
    %c32 = arith.constant 32 : index
    %c0_33 = arith.constant 0 : index
    %98 = vector.load %arg11[%c32, %c0_33] : memref<64x128xf32, #tpu.memory_space<vmem>>, vector<8x128xf32>
    %99 = arith.addf %98, %93 : vector<8x128xf32>
    %100 = math.tanh %99 : vector<8x128xf32>
    %101 = arith.mulf %100, %5 : vector<8x128xf32>
    %102 = arith.addf %101, %8 : vector<8x128xf32>
    %103 = vector.extract_strided_slice %102 {offsets = [0, 0], sizes = [8, 32], strides = [1, 1]} : vector<8x128xf32> to vector<8x32xf32>
    %104 = vector.extract_strided_slice %102 {offsets = [0, 32], sizes = [8, 32], strides = [1, 1]} : vector<8x128xf32> to vector<8x32xf32>
    %105 = vector.extract_strided_slice %102 {offsets = [0, 64], sizes = [8, 32], strides = [1, 1]} : vector<8x128xf32> to vector<8x32xf32>
    %106 = vector.extract_strided_slice %102 {offsets = [0, 96], sizes = [8, 32], strides = [1, 1]} : vector<8x128xf32> to vector<8x32xf32>
    %107 = arith.mulf %104, %89 : vector<8x32xf32>
    %108 = arith.mulf %103, %106 : vector<8x32xf32>
    %109 = arith.addf %107, %108 : vector<8x32xf32>
    %110 = math.tanh %109 : vector<8x32xf32>
    %111 = arith.mulf %105, %110 : vector<8x32xf32>
    %cst_34 = arith.constant dense<0.000000e+00> : vector<8x256xf32>
    %112 = tpu.matmul %111, %16, %cst_34 {dimension_numbers = #tpu.dot_dimension_numbers<[1], [0], [0], [1], [0, 0, 1, 1], [], []>} : vector<8x32xf32>, vector<32x256xf32>, vector<8x256xf32> -> vector<8x256xf32>
    %113 = vector.extract_strided_slice %112 {offsets = [0, 0], sizes = [8, 128], strides = [1, 1]} : vector<8x256xf32> to vector<8x128xf32>
    %114 = vector.extract_strided_slice %112 {offsets = [0, 128], sizes = [8, 128], strides = [1, 1]} : vector<8x256xf32> to vector<8x128xf32>
    %115 = vector.broadcast %17 : vector<1x128xf32> to vector<8x128xf32>
    %116 = arith.addf %114, %115 : vector<8x128xf32>
    %c32_35 = arith.constant 32 : index
    %c0_36 = arith.constant 0 : index
    %117 = vector.load %arg12[%c32_35, %c0_36] : memref<64x128xf32, #tpu.memory_space<vmem>>, vector<8x128xf32>
    tpu.vector_store %arg12[%c32_35, %c0_36], %116 {strides = array<i32>} : memref<64x128xf32, #tpu.memory_space<vmem>>, vector<8x128xf32>,
    %c40 = arith.constant 40 : index
    %c0_37 = arith.constant 0 : index
    %118 = vector.load %arg11[%c40, %c0_37] : memref<64x128xf32, #tpu.memory_space<vmem>>, vector<8x128xf32>
    %119 = arith.addf %118, %113 : vector<8x128xf32>
    %120 = math.tanh %119 : vector<8x128xf32>
    %121 = arith.mulf %120, %5 : vector<8x128xf32>
    %122 = arith.addf %121, %8 : vector<8x128xf32>
    %123 = vector.extract_strided_slice %122 {offsets = [0, 0], sizes = [8, 32], strides = [1, 1]} : vector<8x128xf32> to vector<8x32xf32>
    %124 = vector.extract_strided_slice %122 {offsets = [0, 32], sizes = [8, 32], strides = [1, 1]} : vector<8x128xf32> to vector<8x32xf32>
    %125 = vector.extract_strided_slice %122 {offsets = [0, 64], sizes = [8, 32], strides = [1, 1]} : vector<8x128xf32> to vector<8x32xf32>
    %126 = vector.extract_strided_slice %122 {offsets = [0, 96], sizes = [8, 32], strides = [1, 1]} : vector<8x128xf32> to vector<8x32xf32>
    %127 = arith.mulf %124, %109 : vector<8x32xf32>
    %128 = arith.mulf %123, %126 : vector<8x32xf32>
    %129 = arith.addf %127, %128 : vector<8x32xf32>
    %130 = math.tanh %129 : vector<8x32xf32>
    %131 = arith.mulf %125, %130 : vector<8x32xf32>
    %cst_38 = arith.constant dense<0.000000e+00> : vector<8x256xf32>
    %132 = tpu.matmul %131, %16, %cst_38 {dimension_numbers = #tpu.dot_dimension_numbers<[1], [0], [0], [1], [0, 0, 1, 1], [], []>} : vector<8x32xf32>, vector<32x256xf32>, vector<8x256xf32> -> vector<8x256xf32>
    %133 = vector.extract_strided_slice %132 {offsets = [0, 0], sizes = [8, 128], strides = [1, 1]} : vector<8x256xf32> to vector<8x128xf32>
    %134 = vector.extract_strided_slice %132 {offsets = [0, 128], sizes = [8, 128], strides = [1, 1]} : vector<8x256xf32> to vector<8x128xf32>
    %135 = vector.broadcast %17 : vector<1x128xf32> to vector<8x128xf32>
    %136 = arith.addf %134, %135 : vector<8x128xf32>
    %c40_39 = arith.constant 40 : index
    %c0_40 = arith.constant 0 : index
    %137 = vector.load %arg12[%c40_39, %c0_40] : memref<64x128xf32, #tpu.memory_space<vmem>>, vector<8x128xf32>
    tpu.vector_store %arg12[%c40_39, %c0_40], %136 {strides = array<i32>} : memref<64x128xf32, #tpu.memory_space<vmem>>, vector<8x128xf32>,
    %c48 = arith.constant 48 : index
    %c0_41 = arith.constant 0 : index
    %138 = vector.load %arg11[%c48, %c0_41] : memref<64x128xf32, #tpu.memory_space<vmem>>, vector<8x128xf32>
    %139 = arith.addf %138, %133 : vector<8x128xf32>
    %140 = math.tanh %139 : vector<8x128xf32>
    %141 = arith.mulf %140, %5 : vector<8x128xf32>
    %142 = arith.addf %141, %8 : vector<8x128xf32>
    %143 = vector.extract_strided_slice %142 {offsets = [0, 0], sizes = [8, 32], strides = [1, 1]} : vector<8x128xf32> to vector<8x32xf32>
    %144 = vector.extract_strided_slice %142 {offsets = [0, 32], sizes = [8, 32], strides = [1, 1]} : vector<8x128xf32> to vector<8x32xf32>
    %145 = vector.extract_strided_slice %142 {offsets = [0, 64], sizes = [8, 32], strides = [1, 1]} : vector<8x128xf32> to vector<8x32xf32>
    %146 = vector.extract_strided_slice %142 {offsets = [0, 96], sizes = [8, 32], strides = [1, 1]} : vector<8x128xf32> to vector<8x32xf32>
    %147 = arith.mulf %144, %129 : vector<8x32xf32>
    %148 = arith.mulf %143, %146 : vector<8x32xf32>
    %149 = arith.addf %147, %148 : vector<8x32xf32>
    %150 = math.tanh %149 : vector<8x32xf32>
    %151 = arith.mulf %145, %150 : vector<8x32xf32>
    %cst_42 = arith.constant dense<0.000000e+00> : vector<8x256xf32>
    %152 = tpu.matmul %151, %16, %cst_42 {dimension_numbers = #tpu.dot_dimension_numbers<[1], [0], [0], [1], [0, 0, 1, 1], [], []>} : vector<8x32xf32>, vector<32x256xf32>, vector<8x256xf32> -> vector<8x256xf32>
    %153 = vector.extract_strided_slice %152 {offsets = [0, 0], sizes = [8, 128], strides = [1, 1]} : vector<8x256xf32> to vector<8x128xf32>
    %154 = vector.extract_strided_slice %152 {offsets = [0, 128], sizes = [8, 128], strides = [1, 1]} : vector<8x256xf32> to vector<8x128xf32>
    %155 = vector.broadcast %17 : vector<1x128xf32> to vector<8x128xf32>
    %156 = arith.addf %154, %155 : vector<8x128xf32>
    %c48_43 = arith.constant 48 : index
    %c0_44 = arith.constant 0 : index
    %157 = vector.load %arg12[%c48_43, %c0_44] : memref<64x128xf32, #tpu.memory_space<vmem>>, vector<8x128xf32>
    tpu.vector_store %arg12[%c48_43, %c0_44], %156 {strides = array<i32>} : memref<64x128xf32, #tpu.memory_space<vmem>>, vector<8x128xf32>,
    %c56 = arith.constant 56 : index
    %c0_45 = arith.constant 0 : index
    %158 = vector.load %arg11[%c56, %c0_45] : memref<64x128xf32, #tpu.memory_space<vmem>>, vector<8x128xf32>
    %159 = arith.addf %158, %153 : vector<8x128xf32>
    %160 = math.tanh %159 : vector<8x128xf32>
    %161 = arith.mulf %160, %5 : vector<8x128xf32>
    %162 = arith.addf %161, %8 : vector<8x128xf32>
    %163 = vector.extract_strided_slice %162 {offsets = [0, 0], sizes = [8, 32], strides = [1, 1]} : vector<8x128xf32> to vector<8x32xf32>
    %164 = vector.extract_strided_slice %162 {offsets = [0, 32], sizes = [8, 32], strides = [1, 1]} : vector<8x128xf32> to vector<8x32xf32>
    %165 = vector.extract_strided_slice %162 {offsets = [0, 64], sizes = [8, 32], strides = [1, 1]} : vector<8x128xf32> to vector<8x32xf32>
    %166 = vector.extract_strided_slice %162 {offsets = [0, 96], sizes = [8, 32], strides = [1, 1]} : vector<8x128xf32> to vector<8x32xf32>
    %167 = arith.mulf %164, %149 : vector<8x32xf32>
    %168 = arith.mulf %163, %166 : vector<8x32xf32>
    %169 = arith.addf %167, %168 : vector<8x32xf32>
    %170 = math.tanh %169 : vector<8x32xf32>
    %171 = arith.mulf %165, %170 : vector<8x32xf32>
    %cst_46 = arith.constant dense<0.000000e+00> : vector<8x256xf32>
    %172 = tpu.matmul %171, %16, %cst_46 {dimension_numbers = #tpu.dot_dimension_numbers<[1], [0], [0], [1], [0, 0, 1, 1], [], []>} : vector<8x32xf32>, vector<32x256xf32>, vector<8x256xf32> -> vector<8x256xf32>
    %173 = vector.extract_strided_slice %172 {offsets = [0, 128], sizes = [8, 128], strides = [1, 1]} : vector<8x256xf32> to vector<8x128xf32>
    %174 = vector.broadcast %17 : vector<1x128xf32> to vector<8x128xf32>
    %175 = arith.addf %173, %174 : vector<8x128xf32>
    %c56_47 = arith.constant 56 : index
    %c0_48 = arith.constant 0 : index
    %176 = vector.load %arg12[%c56_47, %c0_48] : memref<64x128xf32, #tpu.memory_space<vmem>>, vector<8x128xf32>
    tpu.vector_store %arg12[%c56_47, %c0_48], %175 {strides = array<i32>} : memref<64x128xf32, #tpu.memory_space<vmem>>, vector<8x128xf32>,
    %c0_49 = arith.constant 0 : index
    %c0_50 = arith.constant 0 : index
    %177 = vector.load %arg6[%c0_49, %c0_50] : memref<32x256xf32, #tpu.memory_space<vmem>>, vector<32x256xf32>
    %c0_51 = arith.constant 0 : index
    %c0_52 = arith.constant 0 : index
    %178 = vector.load %arg4[%c0_51, %c0_52] : memref<1x128xf32, #tpu.memory_space<vmem>>, vector<1x128xf32>
    %cst_53 = arith.constant 0.000000e+00 : f32
    %179 = vector.broadcast %cst_53 : f32 to vector<8x32xf32>
    %c0_54 = arith.constant 0 : index
    %c0_55 = arith.constant 0 : index
    %180 = vector.load %arg12[%c0_54, %c0_55] : memref<64x128xf32, #tpu.memory_space<vmem>>, vector<8x128xf32>
    %181 = math.tanh %180 : vector<8x128xf32>
    %182 = arith.mulf %181, %5 : vector<8x128xf32>
    %183 = arith.addf %182, %8 : vector<8x128xf32>
    %184 = vector.extract_strided_slice %183 {offsets = [0, 0], sizes = [8, 32], strides = [1, 1]} : vector<8x128xf32> to vector<8x32xf32>
    %185 = vector.extract_strided_slice %183 {offsets = [0, 32], sizes = [8, 32], strides = [1, 1]} : vector<8x128xf32> to vector<8x32xf32>
    %186 = vector.extract_strided_slice %183 {offsets = [0, 64], sizes = [8, 32], strides = [1, 1]} : vector<8x128xf32> to vector<8x32xf32>
    %187 = vector.extract_strided_slice %183 {offsets = [0, 96], sizes = [8, 32], strides = [1, 1]} : vector<8x128xf32> to vector<8x32xf32>
    %188 = arith.mulf %185, %179 : vector<8x32xf32>
    %189 = arith.mulf %184, %187 : vector<8x32xf32>
    %190 = arith.addf %188, %189 : vector<8x32xf32>
    %191 = math.tanh %190 : vector<8x32xf32>
    %192 = arith.mulf %186, %191 : vector<8x32xf32>
    %cst_56 = arith.constant dense<0.000000e+00> : vector<8x256xf32>
    %193 = tpu.matmul %192, %177, %cst_56 {dimension_numbers = #tpu.dot_dimension_numbers<[1], [0], [0], [1], [0, 0, 1, 1], [], []>} : vector<8x32xf32>, vector<32x256xf32>, vector<8x256xf32> -> vector<8x256xf32>
    %194 = vector.extract_strided_slice %193 {offsets = [0, 0], sizes = [8, 128], strides = [1, 1]} : vector<8x256xf32> to vector<8x128xf32>
    %195 = vector.extract_strided_slice %193 {offsets = [0, 128], sizes = [8, 128], strides = [1, 1]} : vector<8x256xf32> to vector<8x128xf32>
    %196 = vector.broadcast %178 : vector<1x128xf32> to vector<8x128xf32>
    %197 = arith.addf %195, %196 : vector<8x128xf32>
    %c0_57 = arith.constant 0 : index
    %c0_58 = arith.constant 0 : index
    %198 = vector.load %arg11[%c0_57, %c0_58] : memref<64x128xf32, #tpu.memory_space<vmem>>, vector<8x128xf32>
    tpu.vector_store %arg11[%c0_57, %c0_58], %197 {strides = array<i32>} : memref<64x128xf32, #tpu.memory_space<vmem>>, vector<8x128xf32>,
    %c8_59 = arith.constant 8 : index
    %c0_60 = arith.constant 0 : index
    %199 = vector.load %arg12[%c8_59, %c0_60] : memref<64x128xf32, #tpu.memory_space<vmem>>, vector<8x128xf32>
    %200 = arith.addf %199, %194 : vector<8x128xf32>
    %201 = math.tanh %200 : vector<8x128xf32>
    %202 = arith.mulf %201, %5 : vector<8x128xf32>
    %203 = arith.addf %202, %8 : vector<8x128xf32>
    %204 = vector.extract_strided_slice %203 {offsets = [0, 0], sizes = [8, 32], strides = [1, 1]} : vector<8x128xf32> to vector<8x32xf32>
    %205 = vector.extract_strided_slice %203 {offsets = [0, 32], sizes = [8, 32], strides = [1, 1]} : vector<8x128xf32> to vector<8x32xf32>
    %206 = vector.extract_strided_slice %203 {offsets = [0, 64], sizes = [8, 32], strides = [1, 1]} : vector<8x128xf32> to vector<8x32xf32>
    %207 = vector.extract_strided_slice %203 {offsets = [0, 96], sizes = [8, 32], strides = [1, 1]} : vector<8x128xf32> to vector<8x32xf32>
    %208 = arith.mulf %205, %190 : vector<8x32xf32>
    %209 = arith.mulf %204, %207 : vector<8x32xf32>
    %210 = arith.addf %208, %209 : vector<8x32xf32>
    %211 = math.tanh %210 : vector<8x32xf32>
    %212 = arith.mulf %206, %211 : vector<8x32xf32>
    %cst_61 = arith.constant dense<0.000000e+00> : vector<8x256xf32>
    %213 = tpu.matmul %212, %177, %cst_61 {dimension_numbers = #tpu.dot_dimension_numbers<[1], [0], [0], [1], [0, 0, 1, 1], [], []>} : vector<8x32xf32>, vector<32x256xf32>, vector<8x256xf32> -> vector<8x256xf32>
    %214 = vector.extract_strided_slice %213 {offsets = [0, 0], sizes = [8, 128], strides = [1, 1]} : vector<8x256xf32> to vector<8x128xf32>
    %215 = vector.extract_strided_slice %213 {offsets = [0, 128], sizes = [8, 128], strides = [1, 1]} : vector<8x256xf32> to vector<8x128xf32>
    %216 = vector.broadcast %178 : vector<1x128xf32> to vector<8x128xf32>
    %217 = arith.addf %215, %216 : vector<8x128xf32>
    %c8_62 = arith.constant 8 : index
    %c0_63 = arith.constant 0 : index
    %218 = vector.load %arg11[%c8_62, %c0_63] : memref<64x128xf32, #tpu.memory_space<vmem>>, vector<8x128xf32>
    tpu.vector_store %arg11[%c8_62, %c0_63], %217 {strides = array<i32>} : memref<64x128xf32, #tpu.memory_space<vmem>>, vector<8x128xf32>,
    %c16_64 = arith.constant 16 : index
    %c0_65 = arith.constant 0 : index
    %219 = vector.load %arg12[%c16_64, %c0_65] : memref<64x128xf32, #tpu.memory_space<vmem>>, vector<8x128xf32>
    %220 = arith.addf %219, %214 : vector<8x128xf32>
    %221 = math.tanh %220 : vector<8x128xf32>
    %222 = arith.mulf %221, %5 : vector<8x128xf32>
    %223 = arith.addf %222, %8 : vector<8x128xf32>
    %224 = vector.extract_strided_slice %223 {offsets = [0, 0], sizes = [8, 32], strides = [1, 1]} : vector<8x128xf32> to vector<8x32xf32>
    %225 = vector.extract_strided_slice %223 {offsets = [0, 32], sizes = [8, 32], strides = [1, 1]} : vector<8x128xf32> to vector<8x32xf32>
    %226 = vector.extract_strided_slice %223 {offsets = [0, 64], sizes = [8, 32], strides = [1, 1]} : vector<8x128xf32> to vector<8x32xf32>
    %227 = vector.extract_strided_slice %223 {offsets = [0, 96], sizes = [8, 32], strides = [1, 1]} : vector<8x128xf32> to vector<8x32xf32>
    %228 = arith.mulf %225, %210 : vector<8x32xf32>
    %229 = arith.mulf %224, %227 : vector<8x32xf32>
    %230 = arith.addf %228, %229 : vector<8x32xf32>
    %231 = math.tanh %230 : vector<8x32xf32>
    %232 = arith.mulf %226, %231 : vector<8x32xf32>
    %cst_66 = arith.constant dense<0.000000e+00> : vector<8x256xf32>
    %233 = tpu.matmul %232, %177, %cst_66 {dimension_numbers = #tpu.dot_dimension_numbers<[1], [0], [0], [1], [0, 0, 1, 1], [], []>} : vector<8x32xf32>, vector<32x256xf32>, vector<8x256xf32> -> vector<8x256xf32>
    %234 = vector.extract_strided_slice %233 {offsets = [0, 0], sizes = [8, 128], strides = [1, 1]} : vector<8x256xf32> to vector<8x128xf32>
    %235 = vector.extract_strided_slice %233 {offsets = [0, 128], sizes = [8, 128], strides = [1, 1]} : vector<8x256xf32> to vector<8x128xf32>
    %236 = vector.broadcast %178 : vector<1x128xf32> to vector<8x128xf32>
    %237 = arith.addf %235, %236 : vector<8x128xf32>
    %c16_67 = arith.constant 16 : index
    %c0_68 = arith.constant 0 : index
    %238 = vector.load %arg11[%c16_67, %c0_68] : memref<64x128xf32, #tpu.memory_space<vmem>>, vector<8x128xf32>
    tpu.vector_store %arg11[%c16_67, %c0_68], %237 {strides = array<i32>} : memref<64x128xf32, #tpu.memory_space<vmem>>, vector<8x128xf32>,
    %c24_69 = arith.constant 24 : index
    %c0_70 = arith.constant 0 : index
    %239 = vector.load %arg12[%c24_69, %c0_70] : memref<64x128xf32, #tpu.memory_space<vmem>>, vector<8x128xf32>
    %240 = arith.addf %239, %234 : vector<8x128xf32>
    %241 = math.tanh %240 : vector<8x128xf32>
    %242 = arith.mulf %241, %5 : vector<8x128xf32>
    %243 = arith.addf %242, %8 : vector<8x128xf32>
    %244 = vector.extract_strided_slice %243 {offsets = [0, 0], sizes = [8, 32], strides = [1, 1]} : vector<8x128xf32> to vector<8x32xf32>
    %245 = vector.extract_strided_slice %243 {offsets = [0, 32], sizes = [8, 32], strides = [1, 1]} : vector<8x128xf32> to vector<8x32xf32>
    %246 = vector.extract_strided_slice %243 {offsets = [0, 64], sizes = [8, 32], strides = [1, 1]} : vector<8x128xf32> to vector<8x32xf32>
    %247 = vector.extract_strided_slice %243 {offsets = [0, 96], sizes = [8, 32], strides = [1, 1]} : vector<8x128xf32> to vector<8x32xf32>
    %248 = arith.mulf %245, %230 : vector<8x32xf32>
    %249 = arith.mulf %244, %247 : vector<8x32xf32>
    %250 = arith.addf %248, %249 : vector<8x32xf32>
    %251 = math.tanh %250 : vector<8x32xf32>
    %252 = arith.mulf %246, %251 : vector<8x32xf32>
    %cst_71 = arith.constant dense<0.000000e+00> : vector<8x256xf32>
    %253 = tpu.matmul %252, %177, %cst_71 {dimension_numbers = #tpu.dot_dimension_numbers<[1], [0], [0], [1], [0, 0, 1, 1], [], []>} : vector<8x32xf32>, vector<32x256xf32>, vector<8x256xf32> -> vector<8x256xf32>
    %254 = vector.extract_strided_slice %253 {offsets = [0, 0], sizes = [8, 128], strides = [1, 1]} : vector<8x256xf32> to vector<8x128xf32>
    %255 = vector.extract_strided_slice %253 {offsets = [0, 128], sizes = [8, 128], strides = [1, 1]} : vector<8x256xf32> to vector<8x128xf32>
    %256 = vector.broadcast %178 : vector<1x128xf32> to vector<8x128xf32>
    %257 = arith.addf %255, %256 : vector<8x128xf32>
    %c24_72 = arith.constant 24 : index
    %c0_73 = arith.constant 0 : index
    %258 = vector.load %arg11[%c24_72, %c0_73] : memref<64x128xf32, #tpu.memory_space<vmem>>, vector<8x128xf32>
    tpu.vector_store %arg11[%c24_72, %c0_73], %257 {strides = array<i32>} : memref<64x128xf32, #tpu.memory_space<vmem>>, vector<8x128xf32>,
    %c32_74 = arith.constant 32 : index
    %c0_75 = arith.constant 0 : index
    %259 = vector.load %arg12[%c32_74, %c0_75] : memref<64x128xf32, #tpu.memory_space<vmem>>, vector<8x128xf32>
    %260 = arith.addf %259, %254 : vector<8x128xf32>
    %261 = math.tanh %260 : vector<8x128xf32>
    %262 = arith.mulf %261, %5 : vector<8x128xf32>
    %263 = arith.addf %262, %8 : vector<8x128xf32>
    %264 = vector.extract_strided_slice %263 {offsets = [0, 0], sizes = [8, 32], strides = [1, 1]} : vector<8x128xf32> to vector<8x32xf32>
    %265 = vector.extract_strided_slice %263 {offsets = [0, 32], sizes = [8, 32], strides = [1, 1]} : vector<8x128xf32> to vector<8x32xf32>
    %266 = vector.extract_strided_slice %263 {offsets = [0, 64], sizes = [8, 32], strides = [1, 1]} : vector<8x128xf32> to vector<8x32xf32>
    %267 = vector.extract_strided_slice %263 {offsets = [0, 96], sizes = [8, 32], strides = [1, 1]} : vector<8x128xf32> to vector<8x32xf32>
    %268 = arith.mulf %265, %250 : vector<8x32xf32>
    %269 = arith.mulf %264, %267 : vector<8x32xf32>
    %270 = arith.addf %268, %269 : vector<8x32xf32>
    %271 = math.tanh %270 : vector<8x32xf32>
    %272 = arith.mulf %266, %271 : vector<8x32xf32>
    %cst_76 = arith.constant dense<0.000000e+00> : vector<8x256xf32>
    %273 = tpu.matmul %272, %177, %cst_76 {dimension_numbers = #tpu.dot_dimension_numbers<[1], [0], [0], [1], [0, 0, 1, 1], [], []>} : vector<8x32xf32>, vector<32x256xf32>, vector<8x256xf32> -> vector<8x256xf32>
    %274 = vector.extract_strided_slice %273 {offsets = [0, 0], sizes = [8, 128], strides = [1, 1]} : vector<8x256xf32> to vector<8x128xf32>
    %275 = vector.extract_strided_slice %273 {offsets = [0, 128], sizes = [8, 128], strides = [1, 1]} : vector<8x256xf32> to vector<8x128xf32>
    %276 = vector.broadcast %178 : vector<1x128xf32> to vector<8x128xf32>
    %277 = arith.addf %275, %276 : vector<8x128xf32>
    %c32_77 = arith.constant 32 : index
    %c0_78 = arith.constant 0 : index
    %278 = vector.load %arg11[%c32_77, %c0_78] : memref<64x128xf32, #tpu.memory_space<vmem>>, vector<8x128xf32>
    tpu.vector_store %arg11[%c32_77, %c0_78], %277 {strides = array<i32>} : memref<64x128xf32, #tpu.memory_space<vmem>>, vector<8x128xf32>,
    %c40_79 = arith.constant 40 : index
    %c0_80 = arith.constant 0 : index
    %279 = vector.load %arg12[%c40_79, %c0_80] : memref<64x128xf32, #tpu.memory_space<vmem>>, vector<8x128xf32>
    %280 = arith.addf %279, %274 : vector<8x128xf32>
    %281 = math.tanh %280 : vector<8x128xf32>
    %282 = arith.mulf %281, %5 : vector<8x128xf32>
    %283 = arith.addf %282, %8 : vector<8x128xf32>
    %284 = vector.extract_strided_slice %283 {offsets = [0, 0], sizes = [8, 32], strides = [1, 1]} : vector<8x128xf32> to vector<8x32xf32>
    %285 = vector.extract_strided_slice %283 {offsets = [0, 32], sizes = [8, 32], strides = [1, 1]} : vector<8x128xf32> to vector<8x32xf32>
    %286 = vector.extract_strided_slice %283 {offsets = [0, 64], sizes = [8, 32], strides = [1, 1]} : vector<8x128xf32> to vector<8x32xf32>
    %287 = vector.extract_strided_slice %283 {offsets = [0, 96], sizes = [8, 32], strides = [1, 1]} : vector<8x128xf32> to vector<8x32xf32>
    %288 = arith.mulf %285, %270 : vector<8x32xf32>
    %289 = arith.mulf %284, %287 : vector<8x32xf32>
    %290 = arith.addf %288, %289 : vector<8x32xf32>
    %291 = math.tanh %290 : vector<8x32xf32>
    %292 = arith.mulf %286, %291 : vector<8x32xf32>
    %cst_81 = arith.constant dense<0.000000e+00> : vector<8x256xf32>
    %293 = tpu.matmul %292, %177, %cst_81 {dimension_numbers = #tpu.dot_dimension_numbers<[1], [0], [0], [1], [0, 0, 1, 1], [], []>} : vector<8x32xf32>, vector<32x256xf32>, vector<8x256xf32> -> vector<8x256xf32>
    %294 = vector.extract_strided_slice %293 {offsets = [0, 0], sizes = [8, 128], strides = [1, 1]} : vector<8x256xf32> to vector<8x128xf32>
    %295 = vector.extract_strided_slice %293 {offsets = [0, 128], sizes = [8, 128], strides = [1, 1]} : vector<8x256xf32> to vector<8x128xf32>
    %296 = vector.broadcast %178 : vector<1x128xf32> to vector<8x128xf32>
    %297 = arith.addf %295, %296 : vector<8x128xf32>
    %c40_82 = arith.constant 40 : index
    %c0_83 = arith.constant 0 : index
    %298 = vector.load %arg11[%c40_82, %c0_83] : memref<64x128xf32, #tpu.memory_space<vmem>>, vector<8x128xf32>
    tpu.vector_store %arg11[%c40_82, %c0_83], %297 {strides = array<i32>} : memref<64x128xf32, #tpu.memory_space<vmem>>, vector<8x128xf32>,
    %c48_84 = arith.constant 48 : index
    %c0_85 = arith.constant 0 : index
    %299 = vector.load %arg12[%c48_84, %c0_85] : memref<64x128xf32, #tpu.memory_space<vmem>>, vector<8x128xf32>
    %300 = arith.addf %299, %294 : vector<8x128xf32>
    %301 = math.tanh %300 : vector<8x128xf32>
    %302 = arith.mulf %301, %5 : vector<8x128xf32>
    %303 = arith.addf %302, %8 : vector<8x128xf32>
    %304 = vector.extract_strided_slice %303 {offsets = [0, 0], sizes = [8, 32], strides = [1, 1]} : vector<8x128xf32> to vector<8x32xf32>
    %305 = vector.extract_strided_slice %303 {offsets = [0, 32], sizes = [8, 32], strides = [1, 1]} : vector<8x128xf32> to vector<8x32xf32>
    %306 = vector.extract_strided_slice %303 {offsets = [0, 64], sizes = [8, 32], strides = [1, 1]} : vector<8x128xf32> to vector<8x32xf32>
    %307 = vector.extract_strided_slice %303 {offsets = [0, 96], sizes = [8, 32], strides = [1, 1]} : vector<8x128xf32> to vector<8x32xf32>
    %308 = arith.mulf %305, %290 : vector<8x32xf32>
    %309 = arith.mulf %304, %307 : vector<8x32xf32>
    %310 = arith.addf %308, %309 : vector<8x32xf32>
    %311 = math.tanh %310 : vector<8x32xf32>
    %312 = arith.mulf %306, %311 : vector<8x32xf32>
    %cst_86 = arith.constant dense<0.000000e+00> : vector<8x256xf32>
    %313 = tpu.matmul %312, %177, %cst_86 {dimension_numbers = #tpu.dot_dimension_numbers<[1], [0], [0], [1], [0, 0, 1, 1], [], []>} : vector<8x32xf32>, vector<32x256xf32>, vector<8x256xf32> -> vector<8x256xf32>
    %314 = vector.extract_strided_slice %313 {offsets = [0, 0], sizes = [8, 128], strides = [1, 1]} : vector<8x256xf32> to vector<8x128xf32>
    %315 = vector.extract_strided_slice %313 {offsets = [0, 128], sizes = [8, 128], strides = [1, 1]} : vector<8x256xf32> to vector<8x128xf32>
    %316 = vector.broadcast %178 : vector<1x128xf32> to vector<8x128xf32>
    %317 = arith.addf %315, %316 : vector<8x128xf32>
    %c48_87 = arith.constant 48 : index
    %c0_88 = arith.constant 0 : index
    %318 = vector.load %arg11[%c48_87, %c0_88] : memref<64x128xf32, #tpu.memory_space<vmem>>, vector<8x128xf32>
    tpu.vector_store %arg11[%c48_87, %c0_88], %317 {strides = array<i32>} : memref<64x128xf32, #tpu.memory_space<vmem>>, vector<8x128xf32>,
    %c56_89 = arith.constant 56 : index
    %c0_90 = arith.constant 0 : index
    %319 = vector.load %arg12[%c56_89, %c0_90] : memref<64x128xf32, #tpu.memory_space<vmem>>, vector<8x128xf32>
    %320 = arith.addf %319, %314 : vector<8x128xf32>
    %321 = math.tanh %320 : vector<8x128xf32>
    %322 = arith.mulf %321, %5 : vector<8x128xf32>
    %323 = arith.addf %322, %8 : vector<8x128xf32>
    %324 = vector.extract_strided_slice %323 {offsets = [0, 0], sizes = [8, 32], strides = [1, 1]} : vector<8x128xf32> to vector<8x32xf32>
    %325 = vector.extract_strided_slice %323 {offsets = [0, 32], sizes = [8, 32], strides = [1, 1]} : vector<8x128xf32> to vector<8x32xf32>
    %326 = vector.extract_strided_slice %323 {offsets = [0, 64], sizes = [8, 32], strides = [1, 1]} : vector<8x128xf32> to vector<8x32xf32>
    %327 = vector.extract_strided_slice %323 {offsets = [0, 96], sizes = [8, 32], strides = [1, 1]} : vector<8x128xf32> to vector<8x32xf32>
    %328 = arith.mulf %325, %310 : vector<8x32xf32>
    %329 = arith.mulf %324, %327 : vector<8x32xf32>
    %330 = arith.addf %328, %329 : vector<8x32xf32>
    %331 = math.tanh %330 : vector<8x32xf32>
    %332 = arith.mulf %326, %331 : vector<8x32xf32>
    %cst_91 = arith.constant dense<0.000000e+00> : vector<8x256xf32>
    %333 = tpu.matmul %332, %177, %cst_91 {dimension_numbers = #tpu.dot_dimension_numbers<[1], [0], [0], [1], [0, 0, 1, 1], [], []>} : vector<8x32xf32>, vector<32x256xf32>, vector<8x256xf32> -> vector<8x256xf32>
    %334 = vector.extract_strided_slice %333 {offsets = [0, 128], sizes = [8, 128], strides = [1, 1]} : vector<8x256xf32> to vector<8x128xf32>
    %335 = vector.broadcast %178 : vector<1x128xf32> to vector<8x128xf32>
    %336 = arith.addf %334, %335 : vector<8x128xf32>
    %c56_92 = arith.constant 56 : index
    %c0_93 = arith.constant 0 : index
    %337 = vector.load %arg11[%c56_92, %c0_93] : memref<64x128xf32, #tpu.memory_space<vmem>>, vector<8x128xf32>
    tpu.vector_store %arg11[%c56_92, %c0_93], %336 {strides = array<i32>} : memref<64x128xf32, #tpu.memory_space<vmem>>, vector<8x128xf32>,
    %c0_94 = arith.constant 0 : index
    %c0_95 = arith.constant 0 : index
    %338 = vector.load %arg7[%c0_94, %c0_95] : memref<32x128xf32, #tpu.memory_space<vmem>>, vector<32x128xf32>
    %cst_96 = arith.constant 0.000000e+00 : f32
    %339 = vector.broadcast %cst_96 : f32 to vector<8x32xf32>
    %c0_97 = arith.constant 0 : index
    %c0_98 = arith.constant 0 : index
    %340 = vector.load %arg11[%c0_97, %c0_98] : memref<64x128xf32, #tpu.memory_space<vmem>>, vector<8x128xf32>
    %341 = math.tanh %340 : vector<8x128xf32>
    %342 = arith.mulf %341, %5 : vector<8x128xf32>
    %343 = arith.addf %342, %8 : vector<8x128xf32>
    %344 = vector.extract_strided_slice %343 {offsets = [0, 0], sizes = [8, 32], strides = [1, 1]} : vector<8x128xf32> to vector<8x32xf32>
    %345 = vector.extract_strided_slice %343 {offsets = [0, 32], sizes = [8, 32], strides = [1, 1]} : vector<8x128xf32> to vector<8x32xf32>
    %346 = vector.extract_strided_slice %343 {offsets = [0, 64], sizes = [8, 32], strides = [1, 1]} : vector<8x128xf32> to vector<8x32xf32>
    %347 = vector.extract_strided_slice %343 {offsets = [0, 96], sizes = [8, 32], strides = [1, 1]} : vector<8x128xf32> to vector<8x32xf32>
    %348 = arith.mulf %345, %339 : vector<8x32xf32>
    %349 = arith.mulf %344, %347 : vector<8x32xf32>
    %350 = arith.addf %348, %349 : vector<8x32xf32>
    %351 = math.tanh %350 : vector<8x32xf32>
    %352 = arith.mulf %346, %351 : vector<8x32xf32>
    %cst_99 = arith.constant dense<0.000000e+00> : vector<8x128xf32>
    %353 = tpu.matmul %352, %338, %cst_99 {dimension_numbers = #tpu.dot_dimension_numbers<[1], [0], [0], [1], [0, 0, 1, 1], [], []>} : vector<8x32xf32>, vector<32x128xf32>, vector<8x128xf32> -> vector<8x128xf32>
    %c8_100 = arith.constant 8 : index
    %c0_101 = arith.constant 0 : index
    %354 = vector.load %arg11[%c8_100, %c0_101] : memref<64x128xf32, #tpu.memory_space<vmem>>, vector<8x128xf32>
    %355 = arith.addf %354, %353 : vector<8x128xf32>
    %356 = math.tanh %355 : vector<8x128xf32>
    %357 = arith.mulf %356, %5 : vector<8x128xf32>
    %358 = arith.addf %357, %8 : vector<8x128xf32>
    %359 = vector.extract_strided_slice %358 {offsets = [0, 0], sizes = [8, 32], strides = [1, 1]} : vector<8x128xf32> to vector<8x32xf32>
    %360 = vector.extract_strided_slice %358 {offsets = [0, 32], sizes = [8, 32], strides = [1, 1]} : vector<8x128xf32> to vector<8x32xf32>
    %361 = vector.extract_strided_slice %358 {offsets = [0, 64], sizes = [8, 32], strides = [1, 1]} : vector<8x128xf32> to vector<8x32xf32>
    %362 = vector.extract_strided_slice %358 {offsets = [0, 96], sizes = [8, 32], strides = [1, 1]} : vector<8x128xf32> to vector<8x32xf32>
    %363 = arith.mulf %360, %350 : vector<8x32xf32>
    %364 = arith.mulf %359, %362 : vector<8x32xf32>
    %365 = arith.addf %363, %364 : vector<8x32xf32>
    %366 = math.tanh %365 : vector<8x32xf32>
    %367 = arith.mulf %361, %366 : vector<8x32xf32>
    %cst_102 = arith.constant dense<0.000000e+00> : vector<8x128xf32>
    %368 = tpu.matmul %367, %338, %cst_102 {dimension_numbers = #tpu.dot_dimension_numbers<[1], [0], [0], [1], [0, 0, 1, 1], [], []>} : vector<8x32xf32>, vector<32x128xf32>, vector<8x128xf32> -> vector<8x128xf32>
    %c16_103 = arith.constant 16 : index
    %c0_104 = arith.constant 0 : index
    %369 = vector.load %arg11[%c16_103, %c0_104] : memref<64x128xf32, #tpu.memory_space<vmem>>, vector<8x128xf32>
    %370 = arith.addf %369, %368 : vector<8x128xf32>
    %371 = math.tanh %370 : vector<8x128xf32>
    %372 = arith.mulf %371, %5 : vector<8x128xf32>
    %373 = arith.addf %372, %8 : vector<8x128xf32>
    %374 = vector.extract_strided_slice %373 {offsets = [0, 0], sizes = [8, 32], strides = [1, 1]} : vector<8x128xf32> to vector<8x32xf32>
    %375 = vector.extract_strided_slice %373 {offsets = [0, 32], sizes = [8, 32], strides = [1, 1]} : vector<8x128xf32> to vector<8x32xf32>
    %376 = vector.extract_strided_slice %373 {offsets = [0, 64], sizes = [8, 32], strides = [1, 1]} : vector<8x128xf32> to vector<8x32xf32>
    %377 = vector.extract_strided_slice %373 {offsets = [0, 96], sizes = [8, 32], strides = [1, 1]} : vector<8x128xf32> to vector<8x32xf32>
    %378 = arith.mulf %375, %365 : vector<8x32xf32>
    %379 = arith.mulf %374, %377 : vector<8x32xf32>
    %380 = arith.addf %378, %379 : vector<8x32xf32>
    %381 = math.tanh %380 : vector<8x32xf32>
    %382 = arith.mulf %376, %381 : vector<8x32xf32>
    %cst_105 = arith.constant dense<0.000000e+00> : vector<8x128xf32>
    %383 = tpu.matmul %382, %338, %cst_105 {dimension_numbers = #tpu.dot_dimension_numbers<[1], [0], [0], [1], [0, 0, 1, 1], [], []>} : vector<8x32xf32>, vector<32x128xf32>, vector<8x128xf32> -> vector<8x128xf32>
    %c24_106 = arith.constant 24 : index
    %c0_107 = arith.constant 0 : index
    %384 = vector.load %arg11[%c24_106, %c0_107] : memref<64x128xf32, #tpu.memory_space<vmem>>, vector<8x128xf32>
    %385 = arith.addf %384, %383 : vector<8x128xf32>
    %386 = math.tanh %385 : vector<8x128xf32>
    %387 = arith.mulf %386, %5 : vector<8x128xf32>
    %388 = arith.addf %387, %8 : vector<8x128xf32>
    %389 = vector.extract_strided_slice %388 {offsets = [0, 0], sizes = [8, 32], strides = [1, 1]} : vector<8x128xf32> to vector<8x32xf32>
    %390 = vector.extract_strided_slice %388 {offsets = [0, 32], sizes = [8, 32], strides = [1, 1]} : vector<8x128xf32> to vector<8x32xf32>
    %391 = vector.extract_strided_slice %388 {offsets = [0, 64], sizes = [8, 32], strides = [1, 1]} : vector<8x128xf32> to vector<8x32xf32>
    %392 = vector.extract_strided_slice %388 {offsets = [0, 96], sizes = [8, 32], strides = [1, 1]} : vector<8x128xf32> to vector<8x32xf32>
    %393 = arith.mulf %390, %380 : vector<8x32xf32>
    %394 = arith.mulf %389, %392 : vector<8x32xf32>
    %395 = arith.addf %393, %394 : vector<8x32xf32>
    %396 = math.tanh %395 : vector<8x32xf32>
    %397 = arith.mulf %391, %396 : vector<8x32xf32>
    %cst_108 = arith.constant dense<0.000000e+00> : vector<8x128xf32>
    %398 = tpu.matmul %397, %338, %cst_108 {dimension_numbers = #tpu.dot_dimension_numbers<[1], [0], [0], [1], [0, 0, 1, 1], [], []>} : vector<8x32xf32>, vector<32x128xf32>, vector<8x128xf32> -> vector<8x128xf32>
    %c32_109 = arith.constant 32 : index
    %c0_110 = arith.constant 0 : index
    %399 = vector.load %arg11[%c32_109, %c0_110] : memref<64x128xf32, #tpu.memory_space<vmem>>, vector<8x128xf32>
    %400 = arith.addf %399, %398 : vector<8x128xf32>
    %401 = math.tanh %400 : vector<8x128xf32>
    %402 = arith.mulf %401, %5 : vector<8x128xf32>
    %403 = arith.addf %402, %8 : vector<8x128xf32>
    %404 = vector.extract_strided_slice %403 {offsets = [0, 0], sizes = [8, 32], strides = [1, 1]} : vector<8x128xf32> to vector<8x32xf32>
    %405 = vector.extract_strided_slice %403 {offsets = [0, 32], sizes = [8, 32], strides = [1, 1]} : vector<8x128xf32> to vector<8x32xf32>
    %406 = vector.extract_strided_slice %403 {offsets = [0, 64], sizes = [8, 32], strides = [1, 1]} : vector<8x128xf32> to vector<8x32xf32>
    %407 = vector.extract_strided_slice %403 {offsets = [0, 96], sizes = [8, 32], strides = [1, 1]} : vector<8x128xf32> to vector<8x32xf32>
    %408 = arith.mulf %405, %395 : vector<8x32xf32>
    %409 = arith.mulf %404, %407 : vector<8x32xf32>
    %410 = arith.addf %408, %409 : vector<8x32xf32>
    %411 = math.tanh %410 : vector<8x32xf32>
    %412 = arith.mulf %406, %411 : vector<8x32xf32>
    %cst_111 = arith.constant dense<0.000000e+00> : vector<8x128xf32>
    %413 = tpu.matmul %412, %338, %cst_111 {dimension_numbers = #tpu.dot_dimension_numbers<[1], [0], [0], [1], [0, 0, 1, 1], [], []>} : vector<8x32xf32>, vector<32x128xf32>, vector<8x128xf32> -> vector<8x128xf32>
    %c40_112 = arith.constant 40 : index
    %c0_113 = arith.constant 0 : index
    %414 = vector.load %arg11[%c40_112, %c0_113] : memref<64x128xf32, #tpu.memory_space<vmem>>, vector<8x128xf32>
    %415 = arith.addf %414, %413 : vector<8x128xf32>
    %416 = math.tanh %415 : vector<8x128xf32>
    %417 = arith.mulf %416, %5 : vector<8x128xf32>
    %418 = arith.addf %417, %8 : vector<8x128xf32>
    %419 = vector.extract_strided_slice %418 {offsets = [0, 0], sizes = [8, 32], strides = [1, 1]} : vector<8x128xf32> to vector<8x32xf32>
    %420 = vector.extract_strided_slice %418 {offsets = [0, 32], sizes = [8, 32], strides = [1, 1]} : vector<8x128xf32> to vector<8x32xf32>
    %421 = vector.extract_strided_slice %418 {offsets = [0, 64], sizes = [8, 32], strides = [1, 1]} : vector<8x128xf32> to vector<8x32xf32>
    %422 = vector.extract_strided_slice %418 {offsets = [0, 96], sizes = [8, 32], strides = [1, 1]} : vector<8x128xf32> to vector<8x32xf32>
    %423 = arith.mulf %420, %410 : vector<8x32xf32>
    %424 = arith.mulf %419, %422 : vector<8x32xf32>
    %425 = arith.addf %423, %424 : vector<8x32xf32>
    %426 = math.tanh %425 : vector<8x32xf32>
    %427 = arith.mulf %421, %426 : vector<8x32xf32>
    %cst_114 = arith.constant dense<0.000000e+00> : vector<8x128xf32>
    %428 = tpu.matmul %427, %338, %cst_114 {dimension_numbers = #tpu.dot_dimension_numbers<[1], [0], [0], [1], [0, 0, 1, 1], [], []>} : vector<8x32xf32>, vector<32x128xf32>, vector<8x128xf32> -> vector<8x128xf32>
    %c48_115 = arith.constant 48 : index
    %c0_116 = arith.constant 0 : index
    %429 = vector.load %arg11[%c48_115, %c0_116] : memref<64x128xf32, #tpu.memory_space<vmem>>, vector<8x128xf32>
    %430 = arith.addf %429, %428 : vector<8x128xf32>
    %431 = math.tanh %430 : vector<8x128xf32>
    %432 = arith.mulf %431, %5 : vector<8x128xf32>
    %433 = arith.addf %432, %8 : vector<8x128xf32>
    %434 = vector.extract_strided_slice %433 {offsets = [0, 0], sizes = [8, 32], strides = [1, 1]} : vector<8x128xf32> to vector<8x32xf32>
    %435 = vector.extract_strided_slice %433 {offsets = [0, 32], sizes = [8, 32], strides = [1, 1]} : vector<8x128xf32> to vector<8x32xf32>
    %436 = vector.extract_strided_slice %433 {offsets = [0, 64], sizes = [8, 32], strides = [1, 1]} : vector<8x128xf32> to vector<8x32xf32>
    %437 = vector.extract_strided_slice %433 {offsets = [0, 96], sizes = [8, 32], strides = [1, 1]} : vector<8x128xf32> to vector<8x32xf32>
    %438 = arith.mulf %435, %425 : vector<8x32xf32>
    %439 = arith.mulf %434, %437 : vector<8x32xf32>
    %440 = arith.addf %438, %439 : vector<8x32xf32>
    %441 = math.tanh %440 : vector<8x32xf32>
    %442 = arith.mulf %436, %441 : vector<8x32xf32>
    %cst_117 = arith.constant dense<0.000000e+00> : vector<8x128xf32>
    %443 = tpu.matmul %442, %338, %cst_117 {dimension_numbers = #tpu.dot_dimension_numbers<[1], [0], [0], [1], [0, 0, 1, 1], [], []>} : vector<8x32xf32>, vector<32x128xf32>, vector<8x128xf32> -> vector<8x128xf32>
    %c56_118 = arith.constant 56 : index
    %c0_119 = arith.constant 0 : index
    %444 = vector.load %arg11[%c56_118, %c0_119] : memref<64x128xf32, #tpu.memory_space<vmem>>, vector<8x128xf32>
    %445 = arith.addf %444, %443 : vector<8x128xf32>
    %446 = math.tanh %445 : vector<8x128xf32>
    %447 = arith.mulf %446, %5 : vector<8x128xf32>
    %448 = arith.addf %447, %8 : vector<8x128xf32>
    %449 = vector.extract_strided_slice %448 {offsets = [0, 0], sizes = [8, 32], strides = [1, 1]} : vector<8x128xf32> to vector<8x32xf32>
    %450 = vector.extract_strided_slice %448 {offsets = [0, 32], sizes = [8, 32], strides = [1, 1]} : vector<8x128xf32> to vector<8x32xf32>
    %451 = vector.extract_strided_slice %448 {offsets = [0, 64], sizes = [8, 32], strides = [1, 1]} : vector<8x128xf32> to vector<8x32xf32>
    %452 = vector.extract_strided_slice %448 {offsets = [0, 96], sizes = [8, 32], strides = [1, 1]} : vector<8x128xf32> to vector<8x32xf32>
    %453 = arith.mulf %450, %440 : vector<8x32xf32>
    %454 = arith.mulf %449, %452 : vector<8x32xf32>
    %455 = arith.addf %453, %454 : vector<8x32xf32>
    %456 = math.tanh %455 : vector<8x32xf32>
    %457 = arith.mulf %451, %456 : vector<8x32xf32>
    %c0_120 = arith.constant 0 : index
    %c0_121 = arith.constant 0 : index
    %458 = vector.load %arg8[%c0_120, %c0_121] : memref<32x128xf32, #tpu.memory_space<vmem>>, vector<32x128xf32>
    %cst_122 = arith.constant dense<0.000000e+00> : vector<8x128xf32>
    %459 = tpu.matmul %457, %458, %cst_122 {dimension_numbers = #tpu.dot_dimension_numbers<[1], [0], [0], [1], [0, 0, 1, 1], [], []>} : vector<8x32xf32>, vector<32x128xf32>, vector<8x128xf32> -> vector<8x128xf32>
    %c0_123 = arith.constant 0 : index
    %c0_124 = arith.constant 0 : index
    %460 = vector.load %arg9[%c0_123, %c0_124] : memref<1x128xf32, #tpu.memory_space<vmem>>, vector<1x128xf32>
    %461 = vector.broadcast %460 : vector<1x128xf32> to vector<8x128xf32>
    %462 = arith.addf %459, %461 : vector<8x128xf32>
    %c0_125 = arith.constant 0 : index
    %c0_126 = arith.constant 0 : index
    %463 = vector.load %arg10[%c0_125, %c0_126] : memref<8x128xf32, #tpu.memory_space<vmem>>, vector<8x128xf32>
    tpu.vector_store %arg10[%c0_125, %c0_126], %462 {strides = array<i32>} : memref<8x128xf32, #tpu.memory_space<vmem>>, vector<8x128xf32>,
    return
  }
}

</mosaic_0001>

<llo_original>
// kernel: tpu_custom_call.1
$region0: #{tpu_custom_call.1}
  #allocation0 [shape = 'u32[]', space=smem, size = 0x4, offset = 0x4, fixed_abs, tag = 'smem constant byte address 0x4 - core index']
  #allocation1 [shape = 'u32[72,128]{1,0:T(1,128)}', space=vmem, size = 0x9000, scoped, tag = 'internal scratch']
  #allocation2 [shape = 'f32[64,128]{1,0:T(8,128)}', space=vmem, size = 0x8000, scoped, tag = 'scratch operand']
  #allocation3 [shape = 'f32[64,128]{1,0:T(8,128)}', space=vmem, size = 0x8000, scoped, tag = 'scratch operand']
  %s0 = inlined_call_operand.vmem [shape: f32[64,8], index: 0, kind: input, shape index: {}]
  %s1 = inlined_call_operand.vmem [shape: f32[8,128], index: 1, kind: input, shape index: {}]
  %s2 = inlined_call_operand.vmem [shape: f32[1,128], index: 2, kind: input, shape index: {}]
  %s3 = inlined_call_operand.vmem [shape: f32[1,128], index: 3, kind: input, shape index: {}]
  %s4 = inlined_call_operand.vmem [shape: f32[1,128], index: 4, kind: input, shape index: {}]
  %s5 = inlined_call_operand.vmem [shape: f32[32,256], index: 5, kind: input, shape index: {}]
  %s6 = inlined_call_operand.hbm [shape: f32[32,256], index: 6, kind: input, shape index: {}]
  %s7 = inlined_call_operand.hbm [shape: f32[32,128], index: 7, kind: input, shape index: {}]
  %s8 = inlined_call_operand.hbm [shape: f32[32,128], index: 8, kind: input, shape index: {}]
  %s9 = inlined_call_operand.vmem [shape: f32[1,128], index: 9, kind: input, shape index: {}]
  %s10 = inlined_call_operand.hbm [shape: f32[8,128], index: 10, kind: output, shape index: {}]
  %s11 = sld [smem:[#allocation0]]
  $region62: #{tpu_custom_call.1} parent=0
    _
  %s13 = ssub.s32 1, %s11
  %s14 = scalar_select 0, %s13, %s11
  $region1: #{tpu_custom_call.1} parent=0
    #allocation4 [shape = 'u8[32768]{0}', space=vmem, size = 0x8000, scoped, tag = 'input window, operand 6, single buffered']
    #allocation5 [shape = 's32[1]{0}', space=sflag, size = 0x4, scoped, tag = 'scoped memory for tpu_custom_call.1']
    #allocation6 [shape = 's32[1]{0}', space=sflag, size = 0x4, scoped, tag = 'scoped memory for tpu_custom_call.1']
    #allocation7 [shape = 'u8[16384]{0}', space=vmem, size = 0x4000, scoped, tag = 'input window, operand 7, single buffered']
    #allocation8 [shape = 's32[1]{0}', space=sflag, size = 0x4, scoped, tag = 'scoped memory for tpu_custom_call.1']
    #allocation9 [shape = 'u8[16384]{0}', space=vmem, size = 0x4000, scoped, tag = 'input window, operand 8, single buffered']
    #allocation10 [shape = 'u8[4096]{0}', space=vmem, size = 0x1000, scoped, tag = 'output window, operand 0, single buffered']
    %15 = vsyncpa [#allocation5], 0
    %16 = vsyncpa [#allocation8], 0
    %17 = vsyncpa [#allocation6], 0
    // Predicated region
    $region2: #{tpu_custom_call.1} parent=1 // pred_check
      _
    $region3: #{tpu_custom_call.1} parent=1 // pred_check_branch
      %19 = sbr.rel (0) target = $region5
    $region4: #{tpu_custom_call.1} parent=1 // pred_region
      _
    $region5: #{tpu_custom_call.1} parent=1 // pred_fallthru
      _
    // Predicated region
    $region6: #{tpu_custom_call.1} parent=1 // pred_check
      _
    $region7: #{tpu_custom_call.1} parent=1 // pred_check_branch
      %21 = sbr.rel (0) target = $region9
    $region8: #{tpu_custom_call.1} parent=1 // pred_region
      _
    $region9: #{tpu_custom_call.1} parent=1 // pred_fallthru
      _
    // Predicated region
    $region10: #{tpu_custom_call.1} parent=1 // pred_check
      _
    $region11: #{tpu_custom_call.1} parent=1 // pred_check_branch
      %23 = sbr.rel (0) target = $region13
    $region12: #{tpu_custom_call.1} parent=1 // pred_region
      _
    $region13: #{tpu_custom_call.1} parent=1 // pred_fallthru
      _
    // Predicated region
    $region14: #{tpu_custom_call.1} parent=1 // pred_check
      _
    $region15: #{tpu_custom_call.1} parent=1 // pred_check_branch
      %25 = sbr.rel (0) target = $region17
    $region16: #{tpu_custom_call.1} parent=1 // pred_region
      _
    $region17: #{tpu_custom_call.1} parent=1 // pred_fallthru
      _
    // Predicated region
    $region18: #{tpu_custom_call.1} parent=1 // pred_check
      _
    $region19: #{tpu_custom_call.1} parent=1 // pred_check_branch
      %27 = sbr.rel (0) target = $region21
    $region20: #{tpu_custom_call.1} parent=1 // pred_region
      _
    $region21: #{tpu_custom_call.1} parent=1 // pred_fallthru
      _
    // Predicated region
    $region22: #{tpu_custom_call.1} parent=1 // pred_check
      _
    $region23: #{tpu_custom_call.1} parent=1 // pred_check_branch
      %29 = sbr.rel (0) target = $region25
    $region24: #{tpu_custom_call.1} parent=1 // pred_region
      _
    $region25: #{tpu_custom_call.1} parent=1 // pred_fallthru
      _
    // Predicated region
    $region26: #{tpu_custom_call.1} parent=1 // pred_check
      _
    $region27: #{tpu_custom_call.1} parent=1 // pred_check_branch
      %31 = sbr.rel (0) target = $region29
    $region28: #{tpu_custom_call.1} parent=1 // pred_region
      %33 = vsyncadd [#allocation5], 0
      %s34 = sshll.u32 %s6, 4
      %s35 = int_to_ptr.hbm [resolvable:$true] %s34
      %s36 = sshll.u32 [#allocation4], 4
      %s37 = int_to_ptr.vmem [resolvable:$true] %s36
      %42 = dma.hbm_to_vmem [thread:$0]  %s35, 1024, %s37, [#allocation5], 256, 256, 16
    $region29: #{tpu_custom_call.1} parent=1 // pred_fallthru
      _
    // Predicated region
    $region30: #{tpu_custom_call.1} parent=1 // pred_check
      _
    $region31: #{tpu_custom_call.1} parent=1 // pred_check_branch
      %44 = sbr.rel (0) target = $region33
    $region32: #{tpu_custom_call.1} parent=1 // pred_region
      %46 = vsyncadd [#allocation8], 0
      %s47 = sshll.u32 %s7, 4
      %s48 = int_to_ptr.hbm [resolvable:$true] %s47
      %s49 = sshll.u32 [#allocation7], 4
      %s50 = int_to_ptr.vmem [resolvable:$true] %s49
      %55 = dma.hbm_to_vmem [thread:$0]  %s48, 512, %s50, [#allocation8], 128, 128, 8
    $region33: #{tpu_custom_call.1} parent=1 // pred_fallthru
      _
    // Predicated region
    $region34: #{tpu_custom_call.1} parent=1 // pred_check
      _
    $region35: #{tpu_custom_call.1} parent=1 // pred_check_branch
      %57 = sbr.rel (0) target = $region37
    $region36: #{tpu_custom_call.1} parent=1 // pred_region
      %59 = vsyncadd [#allocation8], 0
      %s60 = sshll.u32 %s8, 4
      %s61 = int_to_ptr.hbm [resolvable:$true] %s60
      %s62 = sshll.u32 [#allocation9], 4
      %s63 = int_to_ptr.vmem [resolvable:$true] %s62
      %68 = dma.hbm_to_vmem [thread:$0]  %s61, 512, %s63, [#allocation8], 128, 128, 8
    $region37: #{tpu_custom_call.1} parent=1 // pred_fallthru
      _
    // Predicated region
    $region38: #{tpu_custom_call.1} parent=1 // pred_check
      _
    $region39: #{tpu_custom_call.1} parent=1 // pred_check_branch
      %70 = sbr.rel (0) target = $region41
    $region40: #{tpu_custom_call.1} parent=1 // pred_region
      _
    $region41: #{tpu_custom_call.1} parent=1 // pred_fallthru
      _
    // Predicated region
    $region42: #{tpu_custom_call.1} parent=1 // pred_check
      _
    $region43: #{tpu_custom_call.1} parent=1 // pred_check_branch
      %72 = sbr.rel (0) target = $region45
    $region44: #{tpu_custom_call.1} parent=1 // pred_region
      %74 = dma.done [#allocation5], 1024
    $region45: #{tpu_custom_call.1} parent=1 // pred_fallthru
      _
    // Predicated region
    $region46: #{tpu_custom_call.1} parent=1 // pred_check
      _
    $region47: #{tpu_custom_call.1} parent=1 // pred_check_branch
      %76 = sbr.rel (0) target = $region49
    $region48: #{tpu_custom_call.1} parent=1 // pred_region
      %78 = dma.done [#allocation8], 512
    $region49: #{tpu_custom_call.1} parent=1 // pred_fallthru
      _
    // Predicated region
    $region50: #{tpu_custom_call.1} parent=1 // pred_check
      _
    $region51: #{tpu_custom_call.1} parent=1 // pred_check_branch
      %80 = sbr.rel (0) target = $region53
    $region52: #{tpu_custom_call.1} parent=1 // pred_region
      %82 = dma.done [#allocation8], 512
    $region53: #{tpu_custom_call.1} parent=1 // pred_fallthru
      _
    %v83 = vlaneseq
    %v84 = vand.u32 %v83, 127
    %vm85 = vcmp.lt.s32.totalorder %v84, 96
    %v86 = vsel %vm85, 0.5, 1.0
    %v87 = vsel %vm85, 0.5, 0.0
    %v88 = vld [vmem:[%s0] sm:$0xff]
    %v89 = vld [vmem:[%s0 + $0x8] sm:$0xff]
    %v90 = vld [vmem:[%s0 + $0x10] sm:$0xff]
    %v91 = vld [vmem:[%s0 + $0x18] sm:$0xff]
    %v92 = vld [vmem:[%s0 + $0x20] sm:$0xff]
    %v93 = vld [vmem:[%s0 + $0x28] sm:$0xff]
    %v94 = vld [vmem:[%s0 + $0x30] sm:$0xff]
    %v95 = vld [vmem:[%s0 + $0x38] sm:$0xff]
    %v96 = vld [vmem:[%s1] sm:$0xff]
    %v97 = vld [vmem:[%s2] sm:$0x1]
    %v99 = vperm.slane %v97, 0
    %vm101 = vcmask 64512
    %v103 = vsel %vm101, %v88, 0
    %v106 = vsel %vm101, %v89, 0
    %v109 = vsel %vm101, %v90, 0
    %v112 = vsel %vm101, %v91, 0
    %v115 = vsel %vm101, %v92, 0
    %v118 = vsel %vm101, %v93, 0
    %v121 = vsel %vm101, %v94, 0
    %v124 = vsel %vm101, %v95, 0
    %126 = vmatpush.msra.mxu0 0.0
    %127 = vmatpush.msra.mxu0 0.0
    %128 = vmatpush.msra.mxu0 0.0
    %129 = vmatpush.msra.mxu0 0.0
    %130 = vmatpush.msra.mxu0 0.0
    %131 = vmatpush.msra.mxu0 0.0
    %132 = vmatpush.msra.mxu0 0.0
    %133 = vmatpush.msra.mxu0 0.0
    %134 = vmatpush.msra.mxu0 0.0
    %135 = vmatpush.msra.mxu0 0.0
    %136 = vmatpush.msra.mxu0 0.0
    %137 = vmatpush.msra.mxu0 0.0
    %138 = vmatpush.msra.mxu0 0.0
    %139 = vmatpush.msra.mxu0 0.0
    %140 = vmatpush.msra.mxu0 0.0
    %141 = vmatpush.msra.mxu0 %v96
    %142 = vmatmul.f32.gmra.mxu0 %v103
    %v143 = vpop.f32.mrf.mxu0
    %v144 = vadd.f32 %v99, %v143
    %145 = vmatmul.f32.gmra.mxu0 %v106
    %v146 = vpop.f32.mrf.mxu0
    %v147 = vadd.f32 %v99, %v146
    %148 = vmatmul.f32.gmra.mxu0 %v109
    %v149 = vpop.f32.mrf.mxu0
    %v150 = vadd.f32 %v99, %v149
    %151 = vmatmul.f32.gmra.mxu0 %v112
    %v152 = vpop.f32.mrf.mxu0
    %v153 = vadd.f32 %v99, %v152
    %154 = vmatmul.f32.gmra.mxu0 %v115
    %v155 = vpop.f32.mrf.mxu0
    %v156 = vadd.f32 %v99, %v155
    %157 = vmatmul.f32.gmra.mxu0 %v118
    %v158 = vpop.f32.mrf.mxu0
    %v159 = vadd.f32 %v99, %v158
    %160 = vmatmul.f32.gmra.mxu0 %v121
    %v161 = vpop.f32.mrf.mxu0
    %v162 = vadd.f32 %v99, %v161
    %163 = vmatmul.f32.gmra.mxu0 %v124
    %v164 = vpop.f32.mrf.mxu0
    %v165 = vadd.f32 %v99, %v164
    %166 = vdwg.mxu0
    %167 = vst [vmem:[#allocation2] sm:$0xff] %v144
    %168 = vst [vmem:[#allocation2 + $0x8] sm:$0xff] %v147
    %169 = vst [vmem:[#allocation2 + $0x10] sm:$0xff] %v150
    %170 = vst [vmem:[#allocation2 + $0x18] sm:$0xff] %v153
    %171 = vst [vmem:[#allocation2 + $0x20] sm:$0xff] %v156
    %172 = vst [vmem:[#allocation2 + $0x28] sm:$0xff] %v159
    %173 = vst [vmem:[#allocation2 + $0x30] sm:$0xff] %v162
    %174 = vst [vmem:[#allocation2 + $0x38] sm:$0xff] %v165
    %v175 = vld [vmem:[%s5] sm:$0xff]
    %v176 = vld [vmem:[%s5 + $0x8] sm:$0xff]
    %v177 = vld [vmem:[%s5 + $0x10] sm:$0xff]
    %v178 = vld [vmem:[%s5 + $0x18] sm:$0xff]
    %v179 = vld [vmem:[%s5 + $0x20] sm:$0xff]
    %v180 = vld [vmem:[%s5 + $0x28] sm:$0xff]
    %v181 = vld [vmem:[%s5 + $0x30] sm:$0xff]
    %v182 = vld [vmem:[%s5 + $0x38] sm:$0xff]
    %v183 = vld [vmem:[%s3] sm:$0x1]
    %v184 = vld [vmem:[#allocation2] sm:$0xff]
    %v185 = vtanh.pop %v184
    %v186 = vmul.f32 %v185, %v86
    %v187 = vadd.f32 %v186, %v87
    %v188 = vmul.f32 %v187, 0.0
    %190 = vrot.lane.b32.xlu0 %v187, 32
    %v191 = vpop.permute.xlu0 %190
    %v193 = vmul.f32 %v187, %v191
    %195 = vrot.lane.b32.xlu0 %v193, 32
    %v196 = vpop.permute.xlu0 %195
    %v198 = vadd.f32 %v188, %v196
    %v199 = vtanh.pop %v198
    %201 = vrot.lane.b32.xlu0 %v199, 32
    %v202 = vpop.permute.xlu0 %201
    %v204 = vmul.f32 %v187, %v202
    %206 = vrot.lane.b32.xlu0 %v204, 64
    %v207 = vpop.permute.xlu0 %206
    %vm208 = vcmask 261120
    %v209 = vsel %vm208, %v207, 0
    %211 = vmatpush.msra.mxu0 0.0
    %212 = vmatpush.msra.mxu0 0.0
    %213 = vmatpush.msra.mxu0 0.0
    %214 = vmatpush.msra.mxu0 0.0
    %215 = vmatpush.msra.mxu0 0.0
    %216 = vmatpush.msra.mxu0 0.0
    %217 = vmatpush.msra.mxu0 0.0
    %218 = vmatpush.msra.mxu0 0.0
    %219 = vmatpush.msra.mxu0 0.0
    %220 = vmatpush.msra.mxu0 0.0
    %221 = vmatpush.msra.mxu0 0.0
    %222 = vmatpush.msra.mxu0 0.0
    %223 = vmatpush.msra.mxu0 %v181
    %224 = vmatpush.msra.mxu0 %v179
    %225 = vmatpush.msra.mxu0 %v177
    %226 = vmatpush.msra.mxu0 %v175
    %227 = vmatmul.f32.gmra.mxu0 %v209
    %v228 = vpop.f32.mrf.mxu0
    %v229 = vadd.f32 0.0, %v228
    %230 = vdwg.mxu0
    %231 = vmatpush.msra.mxu0 0.0
    %232 = vmatpush.msra.mxu0 0.0
    %233 = vmatpush.msra.mxu0 0.0
    %234 = vmatpush.msra.mxu0 0.0
    %235 = vmatpush.msra.mxu0 0.0
    %236 = vmatpush.msra.mxu0 0.0
    %237 = vmatpush.msra.mxu0 0.0
    %238 = vmatpush.msra.mxu0 0.0
    %239 = vmatpush.msra.mxu0 0.0
    %240 = vmatpush.msra.mxu0 0.0
    %241 = vmatpush.msra.mxu0 0.0
    %242 = vmatpush.msra.mxu0 0.0
    %243 = vmatpush.msra.mxu0 %v182
    %244 = vmatpush.msra.mxu0 %v180
    %245 = vmatpush.msra.mxu0 %v178
    %246 = vmatpush.msra.mxu0 %v176
    %247 = vmatmul.f32.gmra.mxu0 %v209
    %v248 = vpop.f32.mrf.mxu0
    %v249 = vadd.f32 0.0, %v248
    %250 = vdwg.mxu0
    %v252 = vperm.slane %v183, 0
    %v254 = vadd.f32 %v249, %v252
    %255 = vst [vmem:[#allocation3] sm:$0xff] %v254
    %v256 = vld [vmem:[#allocation2 + $0x8] sm:$0xff]
    %v257 = vadd.f32 %v256, %v229
    %v258 = vtanh.pop %v257
    %v259 = vmul.f32 %v258, %v86
    %v260 = vadd.f32 %v259, %v87
    %v261 = vmul.f32 %v260, %v198
    %263 = vrot.lane.b32.xlu0 %v260, 32
    %v264 = vpop.permute.xlu0 %263
    %v266 = vmul.f32 %v260, %v264
    %268 = vrot.lane.b32.xlu0 %v266, 32
    %v269 = vpop.permute.xlu0 %268
    %v271 = vadd.f32 %v261, %v269
    %v272 = vtanh.pop %v271
    %274 = vrot.lane.b32.xlu0 %v272, 32
    %v275 = vpop.permute.xlu0 %274
    %v277 = vmul.f32 %v260, %v275
    %279 = vrot.lane.b32.xlu0 %v277, 64
    %v280 = vpop.permute.xlu0 %279
    %v281 = vsel %vm208, %v280, 0
    %283 = vmatpush.msra.mxu0 0.0
    %284 = vmatpush.msra.mxu0 0.0
    %285 = vmatpush.msra.mxu0 0.0
    %286 = vmatpush.msra.mxu0 0.0
    %287 = vmatpush.msra.mxu0 0.0
    %288 = vmatpush.msra.mxu0 0.0
    %289 = vmatpush.msra.mxu0 0.0
    %290 = vmatpush.msra.mxu0 0.0
    %291 = vmatpush.msra.mxu0 0.0
    %292 = vmatpush.msra.mxu0 0.0
    %293 = vmatpush.msra.mxu0 0.0
    %294 = vmatpush.msra.mxu0 0.0
    %295 = vmatpush.msra.mxu0 %v181
    %296 = vmatpush.msra.mxu0 %v179
    %297 = vmatpush.msra.mxu0 %v177
    %298 = vmatpush.msra.mxu0 %v175
    %299 = vmatmul.f32.gmra.mxu0 %v281
    %v300 = vpop.f32.mrf.mxu0
    %v301 = vadd.f32 0.0, %v300
    %302 = vdwg.mxu0
    %303 = vmatpush.msra.mxu0 0.0
    %304 = vmatpush.msra.mxu0 0.0
    %305 = vmatpush.msra.mxu0 0.0
    %306 = vmatpush.msra.mxu0 0.0
    %307 = vmatpush.msra.mxu0 0.0
    %308 = vmatpush.msra.mxu0 0.0
    %309 = vmatpush.msra.mxu0 0.0
    %310 = vmatpush.msra.mxu0 0.0
    %311 = vmatpush.msra.mxu0 0.0
    %312 = vmatpush.msra.mxu0 0.0
    %313 = vmatpush.msra.mxu0 0.0
    %314 = vmatpush.msra.mxu0 0.0
    %315 = vmatpush.msra.mxu0 %v182
    %316 = vmatpush.msra.mxu0 %v180
    %317 = vmatpush.msra.mxu0 %v178
    %318 = vmatpush.msra.mxu0 %v176
    %319 = vmatmul.f32.gmra.mxu0 %v281
    %v320 = vpop.f32.mrf.mxu0
    %v321 = vadd.f32 0.0, %v320
    %322 = vdwg.mxu0
    %v323 = vadd.f32 %v321, %v252
    %324 = vst [vmem:[#allocation3 + $0x8] sm:$0xff] %v323
    %v325 = vld [vmem:[#allocation2 + $0x10] sm:$0xff]
    %v326 = vadd.f32 %v325, %v301
    %v327 = vtanh.pop %v326
    %v328 = vmul.f32 %v327, %v86
    %v329 = vadd.f32 %v328, %v87
    %v330 = vmul.f32 %v329, %v271
    %332 = vrot.lane.b32.xlu0 %v329, 32
    %v333 = vpop.permute.xlu0 %332
    %v335 = vmul.f32 %v329, %v333
    %337 = vrot.lane.b32.xlu0 %v335, 32
    %v338 = vpop.permute.xlu0 %337
    %v340 = vadd.f32 %v330, %v338
    %v341 = vtanh.pop %v340
    %343 = vrot.lane.b32.xlu0 %v341, 32
    %v344 = vpop.permute.xlu0 %343
    %v346 = vmul.f32 %v329, %v344
    %348 = vrot.lane.b32.xlu0 %v346, 64
    %v349 = vpop.permute.xlu0 %348
    %v350 = vsel %vm208, %v349, 0
    %352 = vmatpush.msra.mxu0 0.0
    %353 = vmatpush.msra.mxu0 0.0
    %354 = vmatpush.msra.mxu0 0.0
    %355 = vmatpush.msra.mxu0 0.0
    %356 = vmatpush.msra.mxu0 0.0
    %357 = vmatpush.msra.mxu0 0.0
    %358 = vmatpush.msra.mxu0 0.0
    %359 = vmatpush.msra.mxu0 0.0
    %360 = vmatpush.msra.mxu0 0.0
    %361 = vmatpush.msra.mxu0 0.0
    %362 = vmatpush.msra.mxu0 0.0
    %363 = vmatpush.msra.mxu0 0.0
    %364 = vmatpush.msra.mxu0 %v181
    %365 = vmatpush.msra.mxu0 %v179
    %366 = vmatpush.msra.mxu0 %v177
    %367 = vmatpush.msra.mxu0 %v175
    %368 = vmatmul.f32.gmra.mxu0 %v350
    %v369 = vpop.f32.mrf.mxu0
    %v370 = vadd.f32 0.0, %v369
    %371 = vdwg.mxu0
    %372 = vmatpush.msra.mxu0 0.0
    %373 = vmatpush.msra.mxu0 0.0
    %374 = vmatpush.msra.mxu0 0.0
    %375 = vmatpush.msra.mxu0 0.0
    %376 = vmatpush.msra.mxu0 0.0
    %377 = vmatpush.msra.mxu0 0.0
    %378 = vmatpush.msra.mxu0 0.0
    %379 = vmatpush.msra.mxu0 0.0
    %380 = vmatpush.msra.mxu0 0.0
    %381 = vmatpush.msra.mxu0 0.0
    %382 = vmatpush.msra.mxu0 0.0
    %383 = vmatpush.msra.mxu0 0.0
    %384 = vmatpush.msra.mxu0 %v182
    %385 = vmatpush.msra.mxu0 %v180
    %386 = vmatpush.msra.mxu0 %v178
    %387 = vmatpush.msra.mxu0 %v176
    %388 = vmatmul.f32.gmra.mxu0 %v350
    %v389 = vpop.f32.mrf.mxu0
    %v390 = vadd.f32 0.0, %v389
    %391 = vdwg.mxu0
    %v392 = vadd.f32 %v390, %v252
    %393 = vst [vmem:[#allocation3 + $0x10] sm:$0xff] %v392
    %v394 = vld [vmem:[#allocation2 + $0x18] sm:$0xff]
    %v395 = vadd.f32 %v394, %v370
    %v396 = vtanh.pop %v395
    %v397 = vmul.f32 %v396, %v86
    %v398 = vadd.f32 %v397, %v87
    %v399 = vmul.f32 %v398, %v340
    %401 = vrot.lane.b32.xlu0 %v398, 32
    %v402 = vpop.permute.xlu0 %401
    %v404 = vmul.f32 %v398, %v402
    %406 = vrot.lane.b32.xlu0 %v404, 32
    %v407 = vpop.permute.xlu0 %406
    %v409 = vadd.f32 %v399, %v407
    %v410 = vtanh.pop %v409
    %412 = vrot.lane.b32.xlu0 %v410, 32
    %v413 = vpop.permute.xlu0 %412
    %v415 = vmul.f32 %v398, %v413
    %417 = vrot.lane.b32.xlu0 %v415, 64
    %v418 = vpop.permute.xlu0 %417
    %v419 = vsel %vm208, %v418, 0
    %421 = vmatpush.msra.mxu0 0.0
    %422 = vmatpush.msra.mxu0 0.0
    %423 = vmatpush.msra.mxu0 0.0
    %424 = vmatpush.msra.mxu0 0.0
    %425 = vmatpush.msra.mxu0 0.0
    %426 = vmatpush.msra.mxu0 0.0
    %427 = vmatpush.msra.mxu0 0.0
    %428 = vmatpush.msra.mxu0 0.0
    %429 = vmatpush.msra.mxu0 0.0
    %430 = vmatpush.msra.mxu0 0.0
    %431 = vmatpush.msra.mxu0 0.0
    %432 = vmatpush.msra.mxu0 0.0
    %433 = vmatpush.msra.mxu0 %v181
    %434 = vmatpush.msra.mxu0 %v179
    %435 = vmatpush.msra.mxu0 %v177
    %436 = vmatpush.msra.mxu0 %v175
    %437 = vmatmul.f32.gmra.mxu0 %v419
    %v438 = vpop.f32.mrf.mxu0
    %v439 = vadd.f32 0.0, %v438
    %440 = vdwg.mxu0
    %441 = vmatpush.msra.mxu0 0.0
    %442 = vmatpush.msra.mxu0 0.0
    %443 = vmatpush.msra.mxu0 0.0
    %444 = vmatpush.msra.mxu0 0.0
    %445 = vmatpush.msra.mxu0 0.0
    %446 = vmatpush.msra.mxu0 0.0
    %447 = vmatpush.msra.mxu0 0.0
    %448 = vmatpush.msra.mxu0 0.0
    %449 = vmatpush.msra.mxu0 0.0
    %450 = vmatpush.msra.mxu0 0.0
    %451 = vmatpush.msra.mxu0 0.0
    %452 = vmatpush.msra.mxu0 0.0
    %453 = vmatpush.msra.mxu0 %v182
    %454 = vmatpush.msra.mxu0 %v180
    %455 = vmatpush.msra.mxu0 %v178
    %456 = vmatpush.msra.mxu0 %v176
    %457 = vmatmul.f32.gmra.mxu0 %v419
    %v458 = vpop.f32.mrf.mxu0
    %v459 = vadd.f32 0.0, %v458
    %460 = vdwg.mxu0
    %v461 = vadd.f32 %v459, %v252
    %462 = vst [vmem:[#allocation3 + $0x18] sm:$0xff] %v461
    %v463 = vld [vmem:[#allocation2 + $0x20] sm:$0xff]
    %v464 = vadd.f32 %v463, %v439
    %v465 = vtanh.pop %v464
    %v466 = vmul.f32 %v465, %v86
    %v467 = vadd.f32 %v466, %v87
    %v468 = vmul.f32 %v467, %v409
    %470 = vrot.lane.b32.xlu0 %v467, 32
    %v471 = vpop.permute.xlu0 %470
    %v473 = vmul.f32 %v467, %v471
    %475 = vrot.lane.b32.xlu0 %v473, 32
    %v476 = vpop.permute.xlu0 %475
    %v478 = vadd.f32 %v468, %v476
    %v479 = vtanh.pop %v478
    %481 = vrot.lane.b32.xlu0 %v479, 32
    %v482 = vpop.permute.xlu0 %481
    %v484 = vmul.f32 %v467, %v482
    %486 = vrot.lane.b32.xlu0 %v484, 64
    %v487 = vpop.permute.xlu0 %486
    %v488 = vsel %vm208, %v487, 0
    %490 = vmatpush.msra.mxu0 0.0
    %491 = vmatpush.msra.mxu0 0.0
    %492 = vmatpush.msra.mxu0 0.0
    %493 = vmatpush.msra.mxu0 0.0
    %494 = vmatpush.msra.mxu0 0.0
    %495 = vmatpush.msra.mxu0 0.0
    %496 = vmatpush.msra.mxu0 0.0
    %497 = vmatpush.msra.mxu0 0.0
    %498 = vmatpush.msra.mxu0 0.0
    %499 = vmatpush.msra.mxu0 0.0
    %500 = vmatpush.msra.mxu0 0.0
    %501 = vmatpush.msra.mxu0 0.0
    %502 = vmatpush.msra.mxu0 %v181
    %503 = vmatpush.msra.mxu0 %v179
    %504 = vmatpush.msra.mxu0 %v177
    %505 = vmatpush.msra.mxu0 %v175
    %506 = vmatmul.f32.gmra.mxu0 %v488
    %v507 = vpop.f32.mrf.mxu0
    %v508 = vadd.f32 0.0, %v507
    %509 = vdwg.mxu0
    %510 = vmatpush.msra.mxu0 0.0
    %511 = vmatpush.msra.mxu0 0.0
    %512 = vmatpush.msra.mxu0 0.0
    %513 = vmatpush.msra.mxu0 0.0
    %514 = vmatpush.msra.mxu0 0.0
    %515 = vmatpush.msra.mxu0 0.0
    %516 = vmatpush.msra.mxu0 0.0
    %517 = vmatpush.msra.mxu0 0.0
    %518 = vmatpush.msra.mxu0 0.0
    %519 = vmatpush.msra.mxu0 0.0
    %520 = vmatpush.msra.mxu0 0.0
    %521 = vmatpush.msra.mxu0 0.0
    %522 = vmatpush.msra.mxu0 %v182
    %523 = vmatpush.msra.mxu0 %v180
    %524 = vmatpush.msra.mxu0 %v178
    %525 = vmatpush.msra.mxu0 %v176
    %526 = vmatmul.f32.gmra.mxu0 %v488
    %v527 = vpop.f32.mrf.mxu0
    %v528 = vadd.f32 0.0, %v527
    %529 = vdwg.mxu0
    %v530 = vadd.f32 %v528, %v252
    %531 = vst [vmem:[#allocation3 + $0x20] sm:$0xff] %v530
    %v532 = vld [vmem:[#allocation2 + $0x28] sm:$0xff]
    %v533 = vadd.f32 %v532, %v508
    %v534 = vtanh.pop %v533
    %v535 = vmul.f32 %v534, %v86
    %v536 = vadd.f32 %v535, %v87
    %v537 = vmul.f32 %v536, %v478
    %539 = vrot.lane.b32.xlu0 %v536, 32
    %v540 = vpop.permute.xlu0 %539
    %v542 = vmul.f32 %v536, %v540
    %544 = vrot.lane.b32.xlu0 %v542, 32
    %v545 = vpop.permute.xlu0 %544
    %v547 = vadd.f32 %v537, %v545
    %v548 = vtanh.pop %v547
    %550 = vrot.lane.b32.xlu0 %v548, 32
    %v551 = vpop.permute.xlu0 %550
    %v553 = vmul.f32 %v536, %v551
    %555 = vrot.lane.b32.xlu0 %v553, 64
    %v556 = vpop.permute.xlu0 %555
    %v557 = vsel %vm208, %v556, 0
    %559 = vmatpush.msra.mxu0 0.0
    %560 = vmatpush.msra.mxu0 0.0
    %561 = vmatpush.msra.mxu0 0.0
    %562 = vmatpush.msra.mxu0 0.0
    %563 = vmatpush.msra.mxu0 0.0
    %564 = vmatpush.msra.mxu0 0.0
    %565 = vmatpush.msra.mxu0 0.0
    %566 = vmatpush.msra.mxu0 0.0
    %567 = vmatpush.msra.mxu0 0.0
    %568 = vmatpush.msra.mxu0 0.0
    %569 = vmatpush.msra.mxu0 0.0
    %570 = vmatpush.msra.mxu0 0.0
    %571 = vmatpush.msra.mxu0 %v181
    %572 = vmatpush.msra.mxu0 %v179
    %573 = vmatpush.msra.mxu0 %v177
    %574 = vmatpush.msra.mxu0 %v175
    %575 = vmatmul.f32.gmra.mxu0 %v557
    %v576 = vpop.f32.mrf.mxu0
    %v577 = vadd.f32 0.0, %v576
    %578 = vdwg.mxu0
    %579 = vmatpush.msra.mxu0 0.0
    %580 = vmatpush.msra.mxu0 0.0
    %581 = vmatpush.msra.mxu0 0.0
    %582 = vmatpush.msra.mxu0 0.0
    %583 = vmatpush.msra.mxu0 0.0
    %584 = vmatpush.msra.mxu0 0.0
    %585 = vmatpush.msra.mxu0 0.0
    %586 = vmatpush.msra.mxu0 0.0
    %587 = vmatpush.msra.mxu0 0.0
    %588 = vmatpush.msra.mxu0 0.0
    %589 = vmatpush.msra.mxu0 0.0
    %590 = vmatpush.msra.mxu0 0.0
    %591 = vmatpush.msra.mxu0 %v182
    %592 = vmatpush.msra.mxu0 %v180
    %593 = vmatpush.msra.mxu0 %v178
    %594 = vmatpush.msra.mxu0 %v176
    %595 = vmatmul.f32.gmra.mxu0 %v557
    %v596 = vpop.f32.mrf.mxu0
    %v597 = vadd.f32 0.0, %v596
    %598 = vdwg.mxu0
    %v599 = vadd.f32 %v597, %v252
    %600 = vst [vmem:[#allocation3 + $0x28] sm:$0xff] %v599
    %v601 = vld [vmem:[#allocation2 + $0x30] sm:$0xff]
    %v602 = vadd.f32 %v601, %v577
    %v603 = vtanh.pop %v602
    %v604 = vmul.f32 %v603, %v86
    %v605 = vadd.f32 %v604, %v87
    %v606 = vmul.f32 %v605, %v547
    %608 = vrot.lane.b32.xlu0 %v605, 32
    %v609 = vpop.permute.xlu0 %608
    %v611 = vmul.f32 %v605, %v609
    %613 = vrot.lane.b32.xlu0 %v611, 32
    %v614 = vpop.permute.xlu0 %613
    %v616 = vadd.f32 %v606, %v614
    %v617 = vtanh.pop %v616
    %619 = vrot.lane.b32.xlu0 %v617, 32
    %v620 = vpop.permute.xlu0 %619
    %v622 = vmul.f32 %v605, %v620
    %624 = vrot.lane.b32.xlu0 %v622, 64
    %v625 = vpop.permute.xlu0 %624
    %v626 = vsel %vm208, %v625, 0
    %628 = vmatpush.msra.mxu0 0.0
    %629 = vmatpush.msra.mxu0 0.0
    %630 = vmatpush.msra.mxu0 0.0
    %631 = vmatpush.msra.mxu0 0.0
    %632 = vmatpush.msra.mxu0 0.0
    %633 = vmatpush.msra.mxu0 0.0
    %634 = vmatpush.msra.mxu0 0.0
    %635 = vmatpush.msra.mxu0 0.0
    %636 = vmatpush.msra.mxu0 0.0
    %637 = vmatpush.msra.mxu0 0.0
    %638 = vmatpush.msra.mxu0 0.0
    %639 = vmatpush.msra.mxu0 0.0
    %640 = vmatpush.msra.mxu0 %v181
    %641 = vmatpush.msra.mxu0 %v179
    %642 = vmatpush.msra.mxu0 %v177
    %643 = vmatpush.msra.mxu0 %v175
    %644 = vmatmul.f32.gmra.mxu0 %v626
    %v645 = vpop.f32.mrf.mxu0
    %v646 = vadd.f32 0.0, %v645
    %647 = vdwg.mxu0
    %648 = vmatpush.msra.mxu0 0.0
    %649 = vmatpush.msra.mxu0 0.0
    %650 = vmatpush.msra.mxu0 0.0
    %651 = vmatpush.msra.mxu0 0.0
    %652 = vmatpush.msra.mxu0 0.0
    %653 = vmatpush.msra.mxu0 0.0
    %654 = vmatpush.msra.mxu0 0.0
    %655 = vmatpush.msra.mxu0 0.0
    %656 = vmatpush.msra.mxu0 0.0
    %657 = vmatpush.msra.mxu0 0.0
    %658 = vmatpush.msra.mxu0 0.0
    %659 = vmatpush.msra.mxu0 0.0
    %660 = vmatpush.msra.mxu0 %v182
    %661 = vmatpush.msra.mxu0 %v180
    %662 = vmatpush.msra.mxu0 %v178
    %663 = vmatpush.msra.mxu0 %v176
    %664 = vmatmul.f32.gmra.mxu0 %v626
    %v665 = vpop.f32.mrf.mxu0
    %v666 = vadd.f32 0.0, %v665
    %667 = vdwg.mxu0
    %v668 = vadd.f32 %v666, %v252
    %669 = vst [vmem:[#allocation3 + $0x30] sm:$0xff] %v668
    %v670 = vld [vmem:[#allocation2 + $0x38] sm:$0xff]
    %v671 = vadd.f32 %v670, %v646
    %v672 = vtanh.pop %v671
    %v673 = vmul.f32 %v672, %v86
    %v674 = vadd.f32 %v673, %v87
    %v675 = vmul.f32 %v674, %v616
    %677 = vrot.lane.b32.xlu0 %v674, 32
    %v678 = vpop.permute.xlu0 %677
    %v680 = vmul.f32 %v674, %v678
    %682 = vrot.lane.b32.xlu0 %v680, 32
    %v683 = vpop.permute.xlu0 %682
    %v685 = vadd.f32 %v675, %v683
    %v686 = vtanh.pop %v685
    %688 = vrot.lane.b32.xlu0 %v686, 32
    %v689 = vpop.permute.xlu0 %688
    %v691 = vmul.f32 %v674, %v689
    %693 = vrot.lane.b32.xlu0 %v691, 64
    %v694 = vpop.permute.xlu0 %693
    %v695 = vsel %vm208, %v694, 0
    %697 = vmatpush.msra.mxu0 0.0
    %698 = vmatpush.msra.mxu0 0.0
    %699 = vmatpush.msra.mxu0 0.0
    %700 = vmatpush.msra.mxu0 0.0
    %701 = vmatpush.msra.mxu0 0.0
    %702 = vmatpush.msra.mxu0 0.0
    %703 = vmatpush.msra.mxu0 0.0
    %704 = vmatpush.msra.mxu0 0.0
    %705 = vmatpush.msra.mxu0 0.0
    %706 = vmatpush.msra.mxu0 0.0
    %707 = vmatpush.msra.mxu0 0.0
    %708 = vmatpush.msra.mxu0 0.0
    %709 = vmatpush.msra.mxu0 %v182
    %710 = vmatpush.msra.mxu0 %v180
    %711 = vmatpush.msra.mxu0 %v178
    %712 = vmatpush.msra.mxu0 %v176
    %713 = vmatmul.f32.gmra.mxu0 %v695
    %v714 = vpop.f32.mrf.mxu0
    %v715 = vadd.f32 0.0, %v714
    %716 = vdwg.mxu0
    %v717 = vadd.f32 %v715, %v252
    %718 = vst [vmem:[#allocation3 + $0x38] sm:$0xff] %v717
    %v719 = vld [vmem:[#allocation4] sm:$0xff]
    %v720 = vld [vmem:[#allocation4 + $0x8] sm:$0xff]
    %v721 = vld [vmem:[#allocation4 + $0x10] sm:$0xff]
    %v722 = vld [vmem:[#allocation4 + $0x18] sm:$0xff]
    %v723 = vld [vmem:[#allocation4 + $0x20] sm:$0xff]
    %v724 = vld [vmem:[#allocation4 + $0x28] sm:$0xff]
    %v725 = vld [vmem:[#allocation4 + $0x30] sm:$0xff]
    %v726 = vld [vmem:[#allocation4 + $0x38] sm:$0xff]
    %v727 = vld [vmem:[%s4] sm:$0x1]
    %v728 = vld [vmem:[#allocation3] sm:$0xff]
    %v729 = vtanh.pop %v728
    %v730 = vmul.f32 %v729, %v86
    %v731 = vadd.f32 %v730, %v87
    %v732 = vmul.f32 %v731, 0.0
    %734 = vrot.lane.b32.xlu0 %v731, 32
    %v735 = vpop.permute.xlu0 %734
    %v737 = vmul.f32 %v731, %v735
    %739 = vrot.lane.b32.xlu0 %v737, 32
    %v740 = vpop.permute.xlu0 %739
    %v742 = vadd.f32 %v732, %v740
    %v743 = vtanh.pop %v742
    %745 = vrot.lane.b32.xlu0 %v743, 32
    %v746 = vpop.permute.xlu0 %745
    %v748 = vmul.f32 %v731, %v746
    %750 = vrot.lane.b32.xlu0 %v748, 64
    %v751 = vpop.permute.xlu0 %750
    %v752 = vsel %vm208, %v751, 0
    %754 = vmatpush.msra.mxu0 0.0
    %755 = vmatpush.msra.mxu0 0.0
    %756 = vmatpush.msra.mxu0 0.0
    %757 = vmatpush.msra.mxu0 0.0
    %758 = vmatpush.msra.mxu0 0.0
    %759 = vmatpush.msra.mxu0 0.0
    %760 = vmatpush.msra.mxu0 0.0
    %761 = vmatpush.msra.mxu0 0.0
    %762 = vmatpush.msra.mxu0 0.0
    %763 = vmatpush.msra.mxu0 0.0
    %764 = vmatpush.msra.mxu0 0.0
    %765 = vmatpush.msra.mxu0 0.0
    %766 = vmatpush.msra.mxu0 %v725
    %767 = vmatpush.msra.mxu0 %v723
    %768 = vmatpush.msra.mxu0 %v721
    %769 = vmatpush.msra.mxu0 %v719
    %770 = vmatmul.f32.gmra.mxu0 %v752
    %v771 = vpop.f32.mrf.mxu0
    %v772 = vadd.f32 0.0, %v771
    %773 = vdwg.mxu0
    %774 = vmatpush.msra.mxu0 0.0
    %775 = vmatpush.msra.mxu0 0.0
    %776 = vmatpush.msra.mxu0 0.0
    %777 = vmatpush.msra.mxu0 0.0
    %778 = vmatpush.msra.mxu0 0.0
    %779 = vmatpush.msra.mxu0 0.0
    %780 = vmatpush.msra.mxu0 0.0
    %781 = vmatpush.msra.mxu0 0.0
    %782 = vmatpush.msra.mxu0 0.0
    %783 = vmatpush.msra.mxu0 0.0
    %784 = vmatpush.msra.mxu0 0.0
    %785 = vmatpush.msra.mxu0 0.0
    %786 = vmatpush.msra.mxu0 %v726
    %787 = vmatpush.msra.mxu0 %v724
    %788 = vmatpush.msra.mxu0 %v722
    %789 = vmatpush.msra.mxu0 %v720
    %790 = vmatmul.f32.gmra.mxu0 %v752
    %v791 = vpop.f32.mrf.mxu0
    %v792 = vadd.f32 0.0, %v791
    %793 = vdwg.mxu0
    %v795 = vperm.slane %v727, 0
    %v797 = vadd.f32 %v792, %v795
    %798 = vst [vmem:[#allocation2] sm:$0xff] %v797
    %v799 = vld [vmem:[#allocation3 + $0x8] sm:$0xff]
    %v800 = vadd.f32 %v799, %v772
    %v801 = vtanh.pop %v800
    %v802 = vmul.f32 %v801, %v86
    %v803 = vadd.f32 %v802, %v87
    %v804 = vmul.f32 %v803, %v742
    %806 = vrot.lane.b32.xlu0 %v803, 32
    %v807 = vpop.permute.xlu0 %806
    %v809 = vmul.f32 %v803, %v807
    %811 = vrot.lane.b32.xlu0 %v809, 32
    %v812 = vpop.permute.xlu0 %811
    %v814 = vadd.f32 %v804, %v812
    %v815 = vtanh.pop %v814
    %817 = vrot.lane.b32.xlu0 %v815, 32
    %v818 = vpop.permute.xlu0 %817
    %v820 = vmul.f32 %v803, %v818
    %822 = vrot.lane.b32.xlu0 %v820, 64
    %v823 = vpop.permute.xlu0 %822
    %v824 = vsel %vm208, %v823, 0
    %826 = vmatpush.msra.mxu0 0.0
    %827 = vmatpush.msra.mxu0 0.0
    %828 = vmatpush.msra.mxu0 0.0
    %829 = vmatpush.msra.mxu0 0.0
    %830 = vmatpush.msra.mxu0 0.0
    %831 = vmatpush.msra.mxu0 0.0
    %832 = vmatpush.msra.mxu0 0.0
    %833 = vmatpush.msra.mxu0 0.0
    %834 = vmatpush.msra.mxu0 0.0
    %835 = vmatpush.msra.mxu0 0.0
    %836 = vmatpush.msra.mxu0 0.0
    %837 = vmatpush.msra.mxu0 0.0
    %838 = vmatpush.msra.mxu0 %v725
    %839 = vmatpush.msra.mxu0 %v723
    %840 = vmatpush.msra.mxu0 %v721
    %841 = vmatpush.msra.mxu0 %v719
    %842 = vmatmul.f32.gmra.mxu0 %v824
    %v843 = vpop.f32.mrf.mxu0
    %v844 = vadd.f32 0.0, %v843
    %845 = vdwg.mxu0
    %846 = vmatpush.msra.mxu0 0.0
    %847 = vmatpush.msra.mxu0 0.0
    %848 = vmatpush.msra.mxu0 0.0
    %849 = vmatpush.msra.mxu0 0.0
    %850 = vmatpush.msra.mxu0 0.0
    %851 = vmatpush.msra.mxu0 0.0
    %852 = vmatpush.msra.mxu0 0.0
    %853 = vmatpush.msra.mxu0 0.0
    %854 = vmatpush.msra.mxu0 0.0
    %855 = vmatpush.msra.mxu0 0.0
    %856 = vmatpush.msra.mxu0 0.0
    %857 = vmatpush.msra.mxu0 0.0
    %858 = vmatpush.msra.mxu0 %v726
    %859 = vmatpush.msra.mxu0 %v724
    %860 = vmatpush.msra.mxu0 %v722
    %861 = vmatpush.msra.mxu0 %v720
    %862 = vmatmul.f32.gmra.mxu0 %v824
    %v863 = vpop.f32.mrf.mxu0
    %v864 = vadd.f32 0.0, %v863
    %865 = vdwg.mxu0
    %v866 = vadd.f32 %v864, %v795
    %867 = vst [vmem:[#allocation2 + $0x8] sm:$0xff] %v866
    %v868 = vld [vmem:[#allocation3 + $0x10] sm:$0xff]
    %v869 = vadd.f32 %v868, %v844
    %v870 = vtanh.pop %v869
    %v871 = vmul.f32 %v870, %v86
    %v872 = vadd.f32 %v871, %v87
    %v873 = vmul.f32 %v872, %v814
    %875 = vrot.lane.b32.xlu0 %v872, 32
    %v876 = vpop.permute.xlu0 %875
    %v878 = vmul.f32 %v872, %v876
    %880 = vrot.lane.b32.xlu0 %v878, 32
    %v881 = vpop.permute.xlu0 %880
    %v883 = vadd.f32 %v873, %v881
    %v884 = vtanh.pop %v883
    %886 = vrot.lane.b32.xlu0 %v884, 32
    %v887 = vpop.permute.xlu0 %886
    %v889 = vmul.f32 %v872, %v887
    %891 = vrot.lane.b32.xlu0 %v889, 64
    %v892 = vpop.permute.xlu0 %891
    %v893 = vsel %vm208, %v892, 0
    %895 = vmatpush.msra.mxu0 0.0
    %896 = vmatpush.msra.mxu0 0.0
    %897 = vmatpush.msra.mxu0 0.0
    %898 = vmatpush.msra.mxu0 0.0
    %899 = vmatpush.msra.mxu0 0.0
    %900 = vmatpush.msra.mxu0 0.0
    %901 = vmatpush.msra.mxu0 0.0
    %902 = vmatpush.msra.mxu0 0.0
    %903 = vmatpush.msra.mxu0 0.0
    %904 = vmatpush.msra.mxu0 0.0
    %905 = vmatpush.msra.mxu0 0.0
    %906 = vmatpush.msra.mxu0 0.0
    %907 = vmatpush.msra.mxu0 %v725
    %908 = vmatpush.msra.mxu0 %v723
    %909 = vmatpush.msra.mxu0 %v721
    %910 = vmatpush.msra.mxu0 %v719
    %911 = vmatmul.f32.gmra.mxu0 %v893
    %v912 = vpop.f32.mrf.mxu0
    %v913 = vadd.f32 0.0, %v912
    %914 = vdwg.mxu0
    %915 = vmatpush.msra.mxu0 0.0
    %916 = vmatpush.msra.mxu0 0.0
    %917 = vmatpush.msra.mxu0 0.0
    %918 = vmatpush.msra.mxu0 0.0
    %919 = vmatpush.msra.mxu0 0.0
    %920 = vmatpush.msra.mxu0 0.0
    %921 = vmatpush.msra.mxu0 0.0
    %922 = vmatpush.msra.mxu0 0.0
    %923 = vmatpush.msra.mxu0 0.0
    %924 = vmatpush.msra.mxu0 0.0
    %925 = vmatpush.msra.mxu0 0.0
    %926 = vmatpush.msra.mxu0 0.0
    %927 = vmatpush.msra.mxu0 %v726
    %928 = vmatpush.msra.mxu0 %v724
    %929 = vmatpush.msra.mxu0 %v722
    %930 = vmatpush.msra.mxu0 %v720
    %931 = vmatmul.f32.gmra.mxu0 %v893
    %v932 = vpop.f32.mrf.mxu0
    %v933 = vadd.f32 0.0, %v932
    %934 = vdwg.mxu0
    %v935 = vadd.f32 %v933, %v795
    %936 = vst [vmem:[#allocation2 + $0x10] sm:$0xff] %v935
    %v937 = vld [vmem:[#allocation3 + $0x18] sm:$0xff]
    %v938 = vadd.f32 %v937, %v913
    %v939 = vtanh.pop %v938
    %v940 = vmul.f32 %v939, %v86
    %v941 = vadd.f32 %v940, %v87
    %v942 = vmul.f32 %v941, %v883
    %944 = vrot.lane.b32.xlu0 %v941, 32
    %v945 = vpop.permute.xlu0 %944
    %v947 = vmul.f32 %v941, %v945
    %949 = vrot.lane.b32.xlu0 %v947, 32
    %v950 = vpop.permute.xlu0 %949
    %v952 = vadd.f32 %v942, %v950
    %v953 = vtanh.pop %v952
    %955 = vrot.lane.b32.xlu0 %v953, 32
    %v956 = vpop.permute.xlu0 %955
    %v958 = vmul.f32 %v941, %v956
    %960 = vrot.lane.b32.xlu0 %v958, 64
    %v961 = vpop.permute.xlu0 %960
    %v962 = vsel %vm208, %v961, 0
    %964 = vmatpush.msra.mxu0 0.0
    %965 = vmatpush.msra.mxu0 0.0
    %966 = vmatpush.msra.mxu0 0.0
    %967 = vmatpush.msra.mxu0 0.0
    %968 = vmatpush.msra.mxu0 0.0
    %969 = vmatpush.msra.mxu0 0.0
    %970 = vmatpush.msra.mxu0 0.0
    %971 = vmatpush.msra.mxu0 0.0
    %972 = vmatpush.msra.mxu0 0.0
    %973 = vmatpush.msra.mxu0 0.0
    %974 = vmatpush.msra.mxu0 0.0
    %975 = vmatpush.msra.mxu0 0.0
    %976 = vmatpush.msra.mxu0 %v725
    %977 = vmatpush.msra.mxu0 %v723
    %978 = vmatpush.msra.mxu0 %v721
    %979 = vmatpush.msra.mxu0 %v719
    %980 = vmatmul.f32.gmra.mxu0 %v962
    %v981 = vpop.f32.mrf.mxu0
    %v982 = vadd.f32 0.0, %v981
    %983 = vdwg.mxu0
    %984 = vmatpush.msra.mxu0 0.0
    %985 = vmatpush.msra.mxu0 0.0
    %986 = vmatpush.msra.mxu0 0.0
    %987 = vmatpush.msra.mxu0 0.0
    %988 = vmatpush.msra.mxu0 0.0
    %989 = vmatpush.msra.mxu0 0.0
    %990 = vmatpush.msra.mxu0 0.0
    %991 = vmatpush.msra.mxu0 0.0
    %992 = vmatpush.msra.mxu0 0.0
    %993 = vmatpush.msra.mxu0 0.0
    %994 = vmatpush.msra.mxu0 0.0
    %995 = vmatpush.msra.mxu0 0.0
    %996 = vmatpush.msra.mxu0 %v726
    %997 = vmatpush.msra.mxu0 %v724
    %998 = vmatpush.msra.mxu0 %v722
    %999 = vmatpush.msra.mxu0 %v720
    %1000 = vmatmul.f32.gmra.mxu0 %v962
    %v1001 = vpop.f32.mrf.mxu0
    %v1002 = vadd.f32 0.0, %v1001
    %1003 = vdwg.mxu0
    %v1004 = vadd.f32 %v1002, %v795
    %1005 = vst [vmem:[#allocation2 + $0x18] sm:$0xff] %v1004
    %v1006 = vld [vmem:[#allocation3 + $0x20] sm:$0xff]
    %v1007 = vadd.f32 %v1006, %v982
    %v1008 = vtanh.pop %v1007
    %v1009 = vmul.f32 %v1008, %v86
    %v1010 = vadd.f32 %v1009, %v87
    %v1011 = vmul.f32 %v1010, %v952
    %1013 = vrot.lane.b32.xlu0 %v1010, 32
    %v1014 = vpop.permute.xlu0 %1013
    %v1016 = vmul.f32 %v1010, %v1014
    %1018 = vrot.lane.b32.xlu0 %v1016, 32
    %v1019 = vpop.permute.xlu0 %1018
    %v1021 = vadd.f32 %v1011, %v1019
    %v1022 = vtanh.pop %v1021
    %1024 = vrot.lane.b32.xlu0 %v1022, 32
    %v1025 = vpop.permute.xlu0 %1024
    %v1027 = vmul.f32 %v1010, %v1025
    %1029 = vrot.lane.b32.xlu0 %v1027, 64
    %v1030 = vpop.permute.xlu0 %1029
    %v1031 = vsel %vm208, %v1030, 0
    %1033 = vmatpush.msra.mxu0 0.0
    %1034 = vmatpush.msra.mxu0 0.0
    %1035 = vmatpush.msra.mxu0 0.0
    %1036 = vmatpush.msra.mxu0 0.0
    %1037 = vmatpush.msra.mxu0 0.0
    %1038 = vmatpush.msra.mxu0 0.0
    %1039 = vmatpush.msra.mxu0 0.0
    %1040 = vmatpush.msra.mxu0 0.0
    %1041 = vmatpush.msra.mxu0 0.0
    %1042 = vmatpush.msra.mxu0 0.0
    %1043 = vmatpush.msra.mxu0 0.0
    %1044 = vmatpush.msra.mxu0 0.0
    %1045 = vmatpush.msra.mxu0 %v725
    %1046 = vmatpush.msra.mxu0 %v723
    %1047 = vmatpush.msra.mxu0 %v721
    %1048 = vmatpush.msra.mxu0 %v719
    %1049 = vmatmul.f32.gmra.mxu0 %v1031
    %v1050 = vpop.f32.mrf.mxu0
    %v1051 = vadd.f32 0.0, %v1050
    %1052 = vdwg.mxu0
    %1053 = vmatpush.msra.mxu0 0.0
    %1054 = vmatpush.msra.mxu0 0.0
    %1055 = vmatpush.msra.mxu0 0.0
    %1056 = vmatpush.msra.mxu0 0.0
    %1057 = vmatpush.msra.mxu0 0.0
    %1058 = vmatpush.msra.mxu0 0.0
    %1059 = vmatpush.msra.mxu0 0.0
    %1060 = vmatpush.msra.mxu0 0.0
    %1061 = vmatpush.msra.mxu0 0.0
    %1062 = vmatpush.msra.mxu0 0.0
    %1063 = vmatpush.msra.mxu0 0.0
    %1064 = vmatpush.msra.mxu0 0.0
    %1065 = vmatpush.msra.mxu0 %v726
    %1066 = vmatpush.msra.mxu0 %v724
    %1067 = vmatpush.msra.mxu0 %v722
    %1068 = vmatpush.msra.mxu0 %v720
    %1069 = vmatmul.f32.gmra.mxu0 %v1031
    %v1070 = vpop.f32.mrf.mxu0
    %v1071 = vadd.f32 0.0, %v1070
    %1072 = vdwg.mxu0
    %v1073 = vadd.f32 %v1071, %v795
    %1074 = vst [vmem:[#allocation2 + $0x20] sm:$0xff] %v1073
    %v1075 = vld [vmem:[#allocation3 + $0x28] sm:$0xff]
    %v1076 = vadd.f32 %v1075, %v1051
    %v1077 = vtanh.pop %v1076
    %v1078 = vmul.f32 %v1077, %v86
    %v1079 = vadd.f32 %v1078, %v87
    %v1080 = vmul.f32 %v1079, %v1021
    %1082 = vrot.lane.b32.xlu0 %v1079, 32
    %v1083 = vpop.permute.xlu0 %1082
    %v1085 = vmul.f32 %v1079, %v1083
    %1087 = vrot.lane.b32.xlu0 %v1085, 32
    %v1088 = vpop.permute.xlu0 %1087
    %v1090 = vadd.f32 %v1080, %v1088
    %v1091 = vtanh.pop %v1090
    %1093 = vrot.lane.b32.xlu0 %v1091, 32
    %v1094 = vpop.permute.xlu0 %1093
    %v1096 = vmul.f32 %v1079, %v1094
    %1098 = vrot.lane.b32.xlu0 %v1096, 64
    %v1099 = vpop.permute.xlu0 %1098
    %v1100 = vsel %vm208, %v1099, 0
    %1102 = vmatpush.msra.mxu0 0.0
    %1103 = vmatpush.msra.mxu0 0.0
    %1104 = vmatpush.msra.mxu0 0.0
    %1105 = vmatpush.msra.mxu0 0.0
    %1106 = vmatpush.msra.mxu0 0.0
    %1107 = vmatpush.msra.mxu0 0.0
    %1108 = vmatpush.msra.mxu0 0.0
    %1109 = vmatpush.msra.mxu0 0.0
    %1110 = vmatpush.msra.mxu0 0.0
    %1111 = vmatpush.msra.mxu0 0.0
    %1112 = vmatpush.msra.mxu0 0.0
    %1113 = vmatpush.msra.mxu0 0.0
    %1114 = vmatpush.msra.mxu0 %v725
    %1115 = vmatpush.msra.mxu0 %v723
    %1116 = vmatpush.msra.mxu0 %v721
    %1117 = vmatpush.msra.mxu0 %v719
    %1118 = vmatmul.f32.gmra.mxu0 %v1100
    %v1119 = vpop.f32.mrf.mxu0
    %v1120 = vadd.f32 0.0, %v1119
    %1121 = vdwg.mxu0
    %1122 = vmatpush.msra.mxu0 0.0
    %1123 = vmatpush.msra.mxu0 0.0
    %1124 = vmatpush.msra.mxu0 0.0
    %1125 = vmatpush.msra.mxu0 0.0
    %1126 = vmatpush.msra.mxu0 0.0
    %1127 = vmatpush.msra.mxu0 0.0
    %1128 = vmatpush.msra.mxu0 0.0
    %1129 = vmatpush.msra.mxu0 0.0
    %1130 = vmatpush.msra.mxu0 0.0
    %1131 = vmatpush.msra.mxu0 0.0
    %1132 = vmatpush.msra.mxu0 0.0
    %1133 = vmatpush.msra.mxu0 0.0
    %1134 = vmatpush.msra.mxu0 %v726
    %1135 = vmatpush.msra.mxu0 %v724
    %1136 = vmatpush.msra.mxu0 %v722
    %1137 = vmatpush.msra.mxu0 %v720
    %1138 = vmatmul.f32.gmra.mxu0 %v1100
    %v1139 = vpop.f32.mrf.mxu0
    %v1140 = vadd.f32 0.0, %v1139
    %1141 = vdwg.mxu0
    %v1142 = vadd.f32 %v1140, %v795
    %1143 = vst [vmem:[#allocation2 + $0x28] sm:$0xff] %v1142
    %v1144 = vld [vmem:[#allocation3 + $0x30] sm:$0xff]
    %v1145 = vadd.f32 %v1144, %v1120
    %v1146 = vtanh.pop %v1145
    %v1147 = vmul.f32 %v1146, %v86
    %v1148 = vadd.f32 %v1147, %v87
    %v1149 = vmul.f32 %v1148, %v1090
    %1151 = vrot.lane.b32.xlu0 %v1148, 32
    %v1152 = vpop.permute.xlu0 %1151
    %v1154 = vmul.f32 %v1148, %v1152
    %1156 = vrot.lane.b32.xlu0 %v1154, 32
    %v1157 = vpop.permute.xlu0 %1156
    %v1159 = vadd.f32 %v1149, %v1157
    %v1160 = vtanh.pop %v1159
    %1162 = vrot.lane.b32.xlu0 %v1160, 32
    %v1163 = vpop.permute.xlu0 %1162
    %v1165 = vmul.f32 %v1148, %v1163
    %1167 = vrot.lane.b32.xlu0 %v1165, 64
    %v1168 = vpop.permute.xlu0 %1167
    %v1169 = vsel %vm208, %v1168, 0
    %1171 = vmatpush.msra.mxu0 0.0
    %1172 = vmatpush.msra.mxu0 0.0
    %1173 = vmatpush.msra.mxu0 0.0
    %1174 = vmatpush.msra.mxu0 0.0
    %1175 = vmatpush.msra.mxu0 0.0
    %1176 = vmatpush.msra.mxu0 0.0
    %1177 = vmatpush.msra.mxu0 0.0
    %1178 = vmatpush.msra.mxu0 0.0
    %1179 = vmatpush.msra.mxu0 0.0
    %1180 = vmatpush.msra.mxu0 0.0
    %1181 = vmatpush.msra.mxu0 0.0
    %1182 = vmatpush.msra.mxu0 0.0
    %1183 = vmatpush.msra.mxu0 %v725
    %1184 = vmatpush.msra.mxu0 %v723
    %1185 = vmatpush.msra.mxu0 %v721
    %1186 = vmatpush.msra.mxu0 %v719
    %1187 = vmatmul.f32.gmra.mxu0 %v1169
    %v1188 = vpop.f32.mrf.mxu0
    %v1189 = vadd.f32 0.0, %v1188
    %1190 = vdwg.mxu0
    %1191 = vmatpush.msra.mxu0 0.0
    %1192 = vmatpush.msra.mxu0 0.0
    %1193 = vmatpush.msra.mxu0 0.0
    %1194 = vmatpush.msra.mxu0 0.0
    %1195 = vmatpush.msra.mxu0 0.0
    %1196 = vmatpush.msra.mxu0 0.0
    %1197 = vmatpush.msra.mxu0 0.0
    %1198 = vmatpush.msra.mxu0 0.0
    %1199 = vmatpush.msra.mxu0 0.0
    %1200 = vmatpush.msra.mxu0 0.0
    %1201 = vmatpush.msra.mxu0 0.0
    %1202 = vmatpush.msra.mxu0 0.0
    %1203 = vmatpush.msra.mxu0 %v726
    %1204 = vmatpush.msra.mxu0 %v724
    %1205 = vmatpush.msra.mxu0 %v722
    %1206 = vmatpush.msra.mxu0 %v720
    %1207 = vmatmul.f32.gmra.mxu0 %v1169
    %v1208 = vpop.f32.mrf.mxu0
    %v1209 = vadd.f32 0.0, %v1208
    %1210 = vdwg.mxu0
    %v1211 = vadd.f32 %v1209, %v795
    %1212 = vst [vmem:[#allocation2 + $0x30] sm:$0xff] %v1211
    %v1213 = vld [vmem:[#allocation3 + $0x38] sm:$0xff]
    %v1214 = vadd.f32 %v1213, %v1189
    %v1215 = vtanh.pop %v1214
    %v1216 = vmul.f32 %v1215, %v86
    %v1217 = vadd.f32 %v1216, %v87
    %v1218 = vmul.f32 %v1217, %v1159
    %1220 = vrot.lane.b32.xlu0 %v1217, 32
    %v1221 = vpop.permute.xlu0 %1220
    %v1223 = vmul.f32 %v1217, %v1221
    %1225 = vrot.lane.b32.xlu0 %v1223, 32
    %v1226 = vpop.permute.xlu0 %1225
    %v1228 = vadd.f32 %v1218, %v1226
    %v1229 = vtanh.pop %v1228
    %1231 = vrot.lane.b32.xlu0 %v1229, 32
    %v1232 = vpop.permute.xlu0 %1231
    %v1234 = vmul.f32 %v1217, %v1232
    %1236 = vrot.lane.b32.xlu0 %v1234, 64
    %v1237 = vpop.permute.xlu0 %1236
    %v1238 = vsel %vm208, %v1237, 0
    %1240 = vmatpush.msra.mxu0 0.0
    %1241 = vmatpush.msra.mxu0 0.0
    %1242 = vmatpush.msra.mxu0 0.0
    %1243 = vmatpush.msra.mxu0 0.0
    %1244 = vmatpush.msra.mxu0 0.0
    %1245 = vmatpush.msra.mxu0 0.0
    %1246 = vmatpush.msra.mxu0 0.0
    %1247 = vmatpush.msra.mxu0 0.0
    %1248 = vmatpush.msra.mxu0 0.0
    %1249 = vmatpush.msra.mxu0 0.0
    %1250 = vmatpush.msra.mxu0 0.0
    %1251 = vmatpush.msra.mxu0 0.0
    %1252 = vmatpush.msra.mxu0 %v726
    %1253 = vmatpush.msra.mxu0 %v724
    %1254 = vmatpush.msra.mxu0 %v722
    %1255 = vmatpush.msra.mxu0 %v720
    %1256 = vmatmul.f32.gmra.mxu0 %v1238
    %v1257 = vpop.f32.mrf.mxu0
    %v1258 = vadd.f32 0.0, %v1257
    %1259 = vdwg.mxu0
    %v1260 = vadd.f32 %v1258, %v795
    %1261 = vst [vmem:[#allocation2 + $0x38] sm:$0xff] %v1260
    %v1262 = vld [vmem:[#allocation7] sm:$0xff]
    %v1263 = vld [vmem:[#allocation7 + $0x8] sm:$0xff]
    %v1264 = vld [vmem:[#allocation7 + $0x10] sm:$0xff]
    %v1265 = vld [vmem:[#allocation7 + $0x18] sm:$0xff]
    %v1266 = vld [vmem:[#allocation2] sm:$0xff]
    %v1267 = vtanh.pop %v1266
    %v1268 = vmul.f32 %v1267, %v86
    %v1269 = vadd.f32 %v1268, %v87
    %v1270 = vmul.f32 %v1269, 0.0
    %1272 = vrot.lane.b32.xlu0 %v1269, 32
    %v1273 = vpop.permute.xlu0 %1272
    %v1275 = vmul.f32 %v1269, %v1273
    %1277 = vrot.lane.b32.xlu0 %v1275, 32
    %v1278 = vpop.permute.xlu0 %1277
    %v1280 = vadd.f32 %v1270, %v1278
    %v1281 = vtanh.pop %v1280
    %1283 = vrot.lane.b32.xlu0 %v1281, 32
    %v1284 = vpop.permute.xlu0 %1283
    %v1286 = vmul.f32 %v1269, %v1284
    %1288 = vrot.lane.b32.xlu0 %v1286, 64
    %v1289 = vpop.permute.xlu0 %1288
    %v1290 = vsel %vm208, %v1289, 0
    %1292 = vmatpush.msra.mxu0 0.0
    %1293 = vmatpush.msra.mxu0 0.0
    %1294 = vmatpush.msra.mxu0 0.0
    %1295 = vmatpush.msra.mxu0 0.0
    %1296 = vmatpush.msra.mxu0 0.0
    %1297 = vmatpush.msra.mxu0 0.0
    %1298 = vmatpush.msra.mxu0 0.0
    %1299 = vmatpush.msra.mxu0 0.0
    %1300 = vmatpush.msra.mxu0 0.0
    %1301 = vmatpush.msra.mxu0 0.0
    %1302 = vmatpush.msra.mxu0 0.0
    %1303 = vmatpush.msra.mxu0 0.0
    %1304 = vmatpush.msra.mxu0 %v1265
    %1305 = vmatpush.msra.mxu0 %v1264
    %1306 = vmatpush.msra.mxu0 %v1263
    %1307 = vmatpush.msra.mxu0 %v1262
    %1308 = vmatmul.f32.gmra.mxu0 %v1290
    %v1309 = vpop.f32.mrf.mxu0
    %v1310 = vadd.f32 0.0, %v1309
    %1311 = vdwg.mxu0
    %v1312 = vld [vmem:[#allocation2 + $0x8] sm:$0xff]
    %v1313 = vadd.f32 %v1312, %v1310
    %v1314 = vtanh.pop %v1313
    %v1315 = vmul.f32 %v1314, %v86
    %v1316 = vadd.f32 %v1315, %v87
    %v1317 = vmul.f32 %v1316, %v1280
    %1319 = vrot.lane.b32.xlu0 %v1316, 32
    %v1320 = vpop.permute.xlu0 %1319
    %v1322 = vmul.f32 %v1316, %v1320
    %1324 = vrot.lane.b32.xlu0 %v1322, 32
    %v1325 = vpop.permute.xlu0 %1324
    %v1327 = vadd.f32 %v1317, %v1325
    %v1328 = vtanh.pop %v1327
    %1330 = vrot.lane.b32.xlu0 %v1328, 32
    %v1331 = vpop.permute.xlu0 %1330
    %v1333 = vmul.f32 %v1316, %v1331
    %1335 = vrot.lane.b32.xlu0 %v1333, 64
    %v1336 = vpop.permute.xlu0 %1335
    %v1337 = vsel %vm208, %v1336, 0
    %1339 = vmatpush.msra.mxu0 0.0
    %1340 = vmatpush.msra.mxu0 0.0
    %1341 = vmatpush.msra.mxu0 0.0
    %1342 = vmatpush.msra.mxu0 0.0
    %1343 = vmatpush.msra.mxu0 0.0
    %1344 = vmatpush.msra.mxu0 0.0
    %1345 = vmatpush.msra.mxu0 0.0
    %1346 = vmatpush.msra.mxu0 0.0
    %1347 = vmatpush.msra.mxu0 0.0
    %1348 = vmatpush.msra.mxu0 0.0
    %1349 = vmatpush.msra.mxu0 0.0
    %1350 = vmatpush.msra.mxu0 0.0
    %1351 = vmatpush.msra.mxu0 %v1265
    %1352 = vmatpush.msra.mxu0 %v1264
    %1353 = vmatpush.msra.mxu0 %v1263
    %1354 = vmatpush.msra.mxu0 %v1262
    %1355 = vmatmul.f32.gmra.mxu0 %v1337
    %v1356 = vpop.f32.mrf.mxu0
    %v1357 = vadd.f32 0.0, %v1356
    %1358 = vdwg.mxu0
    %v1359 = vld [vmem:[#allocation2 + $0x10] sm:$0xff]
    %v1360 = vadd.f32 %v1359, %v1357
    %v1361 = vtanh.pop %v1360
    %v1362 = vmul.f32 %v1361, %v86
    %v1363 = vadd.f32 %v1362, %v87
    %v1364 = vmul.f32 %v1363, %v1327
    %1366 = vrot.lane.b32.xlu0 %v1363, 32
    %v1367 = vpop.permute.xlu0 %1366
    %v1369 = vmul.f32 %v1363, %v1367
    %1371 = vrot.lane.b32.xlu0 %v1369, 32
    %v1372 = vpop.permute.xlu0 %1371
    %v1374 = vadd.f32 %v1364, %v1372
    %v1375 = vtanh.pop %v1374
    %1377 = vrot.lane.b32.xlu0 %v1375, 32
    %v1378 = vpop.permute.xlu0 %1377
    %v1380 = vmul.f32 %v1363, %v1378
    %1382 = vrot.lane.b32.xlu0 %v1380, 64
    %v1383 = vpop.permute.xlu0 %1382
    %v1384 = vsel %vm208, %v1383, 0
    %1386 = vmatpush.msra.mxu0 0.0
    %1387 = vmatpush.msra.mxu0 0.0
    %1388 = vmatpush.msra.mxu0 0.0
    %1389 = vmatpush.msra.mxu0 0.0
    %1390 = vmatpush.msra.mxu0 0.0
    %1391 = vmatpush.msra.mxu0 0.0
    %1392 = vmatpush.msra.mxu0 0.0
    %1393 = vmatpush.msra.mxu0 0.0
    %1394 = vmatpush.msra.mxu0 0.0
    %1395 = vmatpush.msra.mxu0 0.0
    %1396 = vmatpush.msra.mxu0 0.0
    %1397 = vmatpush.msra.mxu0 0.0
    %1398 = vmatpush.msra.mxu0 %v1265
    %1399 = vmatpush.msra.mxu0 %v1264
    %1400 = vmatpush.msra.mxu0 %v1263
    %1401 = vmatpush.msra.mxu0 %v1262
    %1402 = vmatmul.f32.gmra.mxu0 %v1384
    %v1403 = vpop.f32.mrf.mxu0
    %v1404 = vadd.f32 0.0, %v1403
    %1405 = vdwg.mxu0
    %v1406 = vld [vmem:[#allocation2 + $0x18] sm:$0xff]
    %v1407 = vadd.f32 %v1406, %v1404
    %v1408 = vtanh.pop %v1407
    %v1409 = vmul.f32 %v1408, %v86
    %v1410 = vadd.f32 %v1409, %v87
    %v1411 = vmul.f32 %v1410, %v1374
    %1413 = vrot.lane.b32.xlu0 %v1410, 32
    %v1414 = vpop.permute.xlu0 %1413
    %v1416 = vmul.f32 %v1410, %v1414
    %1418 = vrot.lane.b32.xlu0 %v1416, 32
    %v1419 = vpop.permute.xlu0 %1418
    %v1421 = vadd.f32 %v1411, %v1419
    %v1422 = vtanh.pop %v1421
    %1424 = vrot.lane.b32.xlu0 %v1422, 32
    %v1425 = vpop.permute.xlu0 %1424
    %v1427 = vmul.f32 %v1410, %v1425
    %1429 = vrot.lane.b32.xlu0 %v1427, 64
    %v1430 = vpop.permute.xlu0 %1429
    %v1431 = vsel %vm208, %v1430, 0
    %1433 = vmatpush.msra.mxu0 0.0
    %1434 = vmatpush.msra.mxu0 0.0
    %1435 = vmatpush.msra.mxu0 0.0
    %1436 = vmatpush.msra.mxu0 0.0
    %1437 = vmatpush.msra.mxu0 0.0
    %1438 = vmatpush.msra.mxu0 0.0
    %1439 = vmatpush.msra.mxu0 0.0
    %1440 = vmatpush.msra.mxu0 0.0
    %1441 = vmatpush.msra.mxu0 0.0
    %1442 = vmatpush.msra.mxu0 0.0
    %1443 = vmatpush.msra.mxu0 0.0
    %1444 = vmatpush.msra.mxu0 0.0
    %1445 = vmatpush.msra.mxu0 %v1265
    %1446 = vmatpush.msra.mxu0 %v1264
    %1447 = vmatpush.msra.mxu0 %v1263
    %1448 = vmatpush.msra.mxu0 %v1262
    %1449 = vmatmul.f32.gmra.mxu0 %v1431
    %v1450 = vpop.f32.mrf.mxu0
    %v1451 = vadd.f32 0.0, %v1450
    %1452 = vdwg.mxu0
    %v1453 = vld [vmem:[#allocation2 + $0x20] sm:$0xff]
    %v1454 = vadd.f32 %v1453, %v1451
    %v1455 = vtanh.pop %v1454
    %v1456 = vmul.f32 %v1455, %v86
    %v1457 = vadd.f32 %v1456, %v87
    %v1458 = vmul.f32 %v1457, %v1421
    %1460 = vrot.lane.b32.xlu0 %v1457, 32
    %v1461 = vpop.permute.xlu0 %1460
    %v1463 = vmul.f32 %v1457, %v1461
    %1465 = vrot.lane.b32.xlu0 %v1463, 32
    %v1466 = vpop.permute.xlu0 %1465
    %v1468 = vadd.f32 %v1458, %v1466
    %v1469 = vtanh.pop %v1468
    %1471 = vrot.lane.b32.xlu0 %v1469, 32
    %v1472 = vpop.permute.xlu0 %1471
    %v1474 = vmul.f32 %v1457, %v1472
    %1476 = vrot.lane.b32.xlu0 %v1474, 64
    %v1477 = vpop.permute.xlu0 %1476
    %v1478 = vsel %vm208, %v1477, 0
    %1480 = vmatpush.msra.mxu0 0.0
    %1481 = vmatpush.msra.mxu0 0.0
    %1482 = vmatpush.msra.mxu0 0.0
    %1483 = vmatpush.msra.mxu0 0.0
    %1484 = vmatpush.msra.mxu0 0.0
    %1485 = vmatpush.msra.mxu0 0.0
    %1486 = vmatpush.msra.mxu0 0.0
    %1487 = vmatpush.msra.mxu0 0.0
    %1488 = vmatpush.msra.mxu0 0.0
    %1489 = vmatpush.msra.mxu0 0.0
    %1490 = vmatpush.msra.mxu0 0.0
    %1491 = vmatpush.msra.mxu0 0.0
    %1492 = vmatpush.msra.mxu0 %v1265
    %1493 = vmatpush.msra.mxu0 %v1264
    %1494 = vmatpush.msra.mxu0 %v1263
    %1495 = vmatpush.msra.mxu0 %v1262
    %1496 = vmatmul.f32.gmra.mxu0 %v1478
    %v1497 = vpop.f32.mrf.mxu0
    %v1498 = vadd.f32 0.0, %v1497
    %1499 = vdwg.mxu0
    %v1500 = vld [vmem:[#allocation2 + $0x28] sm:$0xff]
    %v1501 = vadd.f32 %v1500, %v1498
    %v1502 = vtanh.pop %v1501
    %v1503 = vmul.f32 %v1502, %v86
    %v1504 = vadd.f32 %v1503, %v87
    %v1505 = vmul.f32 %v1504, %v1468
    %1507 = vrot.lane.b32.xlu0 %v1504, 32
    %v1508 = vpop.permute.xlu0 %1507
    %v1510 = vmul.f32 %v1504, %v1508
    %1512 = vrot.lane.b32.xlu0 %v1510, 32
    %v1513 = vpop.permute.xlu0 %1512
    %v1515 = vadd.f32 %v1505, %v1513
    %v1516 = vtanh.pop %v1515
    %1518 = vrot.lane.b32.xlu0 %v1516, 32
    %v1519 = vpop.permute.xlu0 %1518
    %v1521 = vmul.f32 %v1504, %v1519
    %1523 = vrot.lane.b32.xlu0 %v1521, 64
    %v1524 = vpop.permute.xlu0 %1523
    %v1525 = vsel %vm208, %v1524, 0
    %1527 = vmatpush.msra.mxu0 0.0
    %1528 = vmatpush.msra.mxu0 0.0
    %1529 = vmatpush.msra.mxu0 0.0
    %1530 = vmatpush.msra.mxu0 0.0
    %1531 = vmatpush.msra.mxu0 0.0
    %1532 = vmatpush.msra.mxu0 0.0
    %1533 = vmatpush.msra.mxu0 0.0
    %1534 = vmatpush.msra.mxu0 0.0
    %1535 = vmatpush.msra.mxu0 0.0
    %1536 = vmatpush.msra.mxu0 0.0
    %1537 = vmatpush.msra.mxu0 0.0
    %1538 = vmatpush.msra.mxu0 0.0
    %1539 = vmatpush.msra.mxu0 %v1265
    %1540 = vmatpush.msra.mxu0 %v1264
    %1541 = vmatpush.msra.mxu0 %v1263
    %1542 = vmatpush.msra.mxu0 %v1262
    %1543 = vmatmul.f32.gmra.mxu0 %v1525
    %v1544 = vpop.f32.mrf.mxu0
    %v1545 = vadd.f32 0.0, %v1544
    %1546 = vdwg.mxu0
    %v1547 = vld [vmem:[#allocation2 + $0x30] sm:$0xff]
    %v1548 = vadd.f32 %v1547, %v1545
    %v1549 = vtanh.pop %v1548
    %v1550 = vmul.f32 %v1549, %v86
    %v1551 = vadd.f32 %v1550, %v87
    %v1552 = vmul.f32 %v1551, %v1515
    %1554 = vrot.lane.b32.xlu0 %v1551, 32
    %v1555 = vpop.permute.xlu0 %1554
    %v1557 = vmul.f32 %v1551, %v1555
    %1559 = vrot.lane.b32.xlu0 %v1557, 32
    %v1560 = vpop.permute.xlu0 %1559
    %v1562 = vadd.f32 %v1552, %v1560
    %v1563 = vtanh.pop %v1562
    %1565 = vrot.lane.b32.xlu0 %v1563, 32
    %v1566 = vpop.permute.xlu0 %1565
    %v1568 = vmul.f32 %v1551, %v1566
    %1570 = vrot.lane.b32.xlu0 %v1568, 64
    %v1571 = vpop.permute.xlu0 %1570
    %v1572 = vsel %vm208, %v1571, 0
    %1574 = vmatpush.msra.mxu0 0.0
    %1575 = vmatpush.msra.mxu0 0.0
    %1576 = vmatpush.msra.mxu0 0.0
    %1577 = vmatpush.msra.mxu0 0.0
    %1578 = vmatpush.msra.mxu0 0.0
    %1579 = vmatpush.msra.mxu0 0.0
    %1580 = vmatpush.msra.mxu0 0.0
    %1581 = vmatpush.msra.mxu0 0.0
    %1582 = vmatpush.msra.mxu0 0.0
    %1583 = vmatpush.msra.mxu0 0.0
    %1584 = vmatpush.msra.mxu0 0.0
    %1585 = vmatpush.msra.mxu0 0.0
    %1586 = vmatpush.msra.mxu0 %v1265
    %1587 = vmatpush.msra.mxu0 %v1264
    %1588 = vmatpush.msra.mxu0 %v1263
    %1589 = vmatpush.msra.mxu0 %v1262
    %1590 = vmatmul.f32.gmra.mxu0 %v1572
    %v1591 = vpop.f32.mrf.mxu0
    %v1592 = vadd.f32 0.0, %v1591
    %1593 = vdwg.mxu0
    %v1594 = vld [vmem:[#allocation2 + $0x38] sm:$0xff]
    %v1595 = vadd.f32 %v1594, %v1592
    %v1596 = vtanh.pop %v1595
    %v1597 = vmul.f32 %v1596, %v86
    %v1598 = vadd.f32 %v1597, %v87
    %v1599 = vmul.f32 %v1598, %v1562
    %1601 = vrot.lane.b32.xlu0 %v1598, 32
    %v1602 = vpop.permute.xlu0 %1601
    %v1604 = vmul.f32 %v1598, %v1602
    %1606 = vrot.lane.b32.xlu0 %v1604, 32
    %v1607 = vpop.permute.xlu0 %1606
    %v1609 = vadd.f32 %v1599, %v1607
    %v1610 = vtanh.pop %v1609
    %1612 = vrot.lane.b32.xlu0 %v1610, 32
    %v1613 = vpop.permute.xlu0 %1612
    %v1615 = vmul.f32 %v1598, %v1613
    %v1616 = vld [vmem:[#allocation9] sm:$0xff]
    %v1617 = vld [vmem:[#allocation9 + $0x8] sm:$0xff]
    %v1618 = vld [vmem:[#allocation9 + $0x10] sm:$0xff]
    %v1619 = vld [vmem:[#allocation9 + $0x18] sm:$0xff]
    %v1620 = vld [vmem:[%s9] sm:$0x1]
    %v1622 = vperm.slane %v1620, 0
    %1625 = vrot.lane.b32.xlu0 %v1615, 64
    %v1626 = vpop.permute.xlu0 %1625
    %v1627 = vsel %vm208, %v1626, 0
    %1629 = vmatpush.msra.mxu0 0.0
    %1630 = vmatpush.msra.mxu0 0.0
    %1631 = vmatpush.msra.mxu0 0.0
    %1632 = vmatpush.msra.mxu0 0.0
    %1633 = vmatpush.msra.mxu0 0.0
    %1634 = vmatpush.msra.mxu0 0.0
    %1635 = vmatpush.msra.mxu0 0.0
    %1636 = vmatpush.msra.mxu0 0.0
    %1637 = vmatpush.msra.mxu0 0.0
    %1638 = vmatpush.msra.mxu0 0.0
    %1639 = vmatpush.msra.mxu0 0.0
    %1640 = vmatpush.msra.mxu0 0.0
    %1641 = vmatpush.msra.mxu0 %v1619
    %1642 = vmatpush.msra.mxu0 %v1618
    %1643 = vmatpush.msra.mxu0 %v1617
    %1644 = vmatpush.msra.mxu0 %v1616
    %1645 = vmatmul.f32.gmra.mxu0 %v1627
    %v1646 = vpop.f32.mrf.mxu0
    %v1647 = vadd.f32 %v1622, %v1646
    %1648 = vdwg.mxu0
    %1649 = vst [vmem:[#allocation10] sm:$0xff] %v1647
    // Predicated region
    $region54: #{tpu_custom_call.1} parent=1 // pred_check
      _
    $region55: #{tpu_custom_call.1} parent=1 // pred_check_branch
      %1651 = sbr.rel (0) target = $region57
    $region56: #{tpu_custom_call.1} parent=1 // pred_region
      %1653 = vsyncadd [#allocation6], 0
      %s1655 = sshll.u32 [#allocation10], 4
      %s1656 = int_to_ptr.vmem [resolvable:$true] %s1655
      %s1657 = sshll.u32 %s10, 4
      %s1658 = int_to_ptr.hbm [resolvable:$true] %s1657
      %1660 = dma.vmem_to_hbm [thread:$0]  %s1656, 128, %s1658, [#allocation6]
    $region57: #{tpu_custom_call.1} parent=1 // pred_fallthru
      _
    // Predicated region
    $region58: #{tpu_custom_call.1} parent=1 // pred_check
      _
    $region59: #{tpu_custom_call.1} parent=1 // pred_check_branch
      %1662 = sbr.rel (0) target = $region61
    $region60: #{tpu_custom_call.1} parent=1 // pred_region
      %1664 = dma.done [#allocation6], 128
    $region61: #{tpu_custom_call.1} parent=1 // pred_fallthru
      _
    %1665 = vsyncpa [#allocation5], 1
    %1666 = vsyncpa [#allocation8], 1
    %1667 = vsyncpa [#allocation6], 1

</llo_original>
